<compile_context>
chip_gen: v7x
topology: tpu7x:2x2x1
jax: 0.10.0
libtpu: 0.0.40
codegen_flags: <defaults>
</compile_context>

<pallas_src>
import functools

import jax
import jax.numpy as jnp
import numpy as np
from jax import lax
from jax.experimental import pallas as pl
from jax.experimental.pallas import tpu as pltpu


def _round_up(x, m):
    return ((x + m - 1) // m) * m


# ---------------------------------------------------------------------------
# Kernel 1: per-edge TransE score   gamma - ||h + r - t||_p
# ---------------------------------------------------------------------------
def _edge_score_kernel(h_ref, r_ref, t_ref, o_ref, *, gamma, dist_ord):
    diff = h_ref[...] + r_ref[...] - t_ref[...]              # (tile_e, D)  VPU
    red = jnp.abs(diff) if dist_ord == 1 else diff * diff    # |.| or (.)^2

    # Cross-lane reduce + column->row relayout in one op on the otherwise-idle MXU:
    # ones(8,D) contracted with red over D gives the per-edge sums as a lane-major
    # (8, tile_e) tile (rows identical); keep row 0.  HIGHEST precision keeps the
    # f32 reduction accurate (this kernel is DMA-bound, extra MXU passes are free).
    ones8 = jnp.ones((8, red.shape[-1]), jnp.float32)
    row = lax.dot_general(
        ones8, red,
        dimension_numbers=(((1,), (1,)), ((), ())),
        precision=lax.Precision.HIGHEST,
        preferred_element_type=jnp.float32)[0:1, :]          # (1, tile_e)
    if dist_ord != 1:
        row = jnp.sqrt(row)
    o_ref[...] = gamma - row                                 # lane-dense store


def transe_edge_score(head, rel, tail, *, gamma, dist_ord=2, tile_e=4096):
    E, D = head.shape
    # Big tiles amortize the ~0.35us per-grid-step overhead; cap at ~E/2 (x8) so the
    # single "parallel" axis keeps >= 2 steps for v7x's 2 TensorCores.
    tile_e = max(8, min(tile_e, _round_up(pl.cdiv(E, 2), 8)))
    n_tiles = pl.cdiv(E, tile_e)          # uneven grid: no jnp.pad of the inputs

    kernel = functools.partial(_edge_score_kernel, gamma=gamma, dist_ord=dist_ord)
    out = pl.pallas_call(
        kernel,
        out_shape=jax.ShapeDtypeStruct((n_tiles, 1, tile_e), jnp.float32),
        grid_spec=pltpu.PrefetchScalarGridSpec(
            num_scalar_prefetch=0,
            grid=(n_tiles,),
            in_specs=[pl.BlockSpec((tile_e, D), lambda i: (i, 0))] * 3,
            out_specs=pl.BlockSpec((None, 1, tile_e), lambda i: (i, 0, 0)),
        ),
        compiler_params=pltpu.CompilerParams(dimension_semantics=("parallel",)),
    )(head, rel, tail)
    # Boundary-block garbage lands at flat indices >= E and is sliced off here.
    return out.reshape(-1)[:E]                               # (E,) like torch.norm(dim=-1)


# ---------------------------------------------------------------------------
# Kernel 2: negative-sampling l2 score (both neg_head variants):
#   gamma - sqrt(clamp(|a|^2 + |b|^2 - 2 a b^T, 1e-30)) per chunk, on the MXU
# ---------------------------------------------------------------------------
def _neg_l2_kernel(c_ref, r_ref, n_ref, o_ref, *, gamma, rel_sign):
    # Fused relation add/sub (VPU, hidden under the DMAs).
    if rel_sign >= 0:
        a = c_ref[...] + r_ref[...]                          # (cs_tile, D)
    else:
        a = c_ref[...] - r_ref[...]
    b = n_ref[...]                                           # (ns_tile, D)

    # -2 folded into the LHS (cs*D muls) instead of a full (cs,ns)-tile mul; contract
    # over D on both operands so the MXU consumes b untransposed.
    cross = lax.dot_general(
        -2.0 * a, b,
        dimension_numbers=(((1,), (1,)), ((), ())),
        preferred_element_type=jnp.float32)                  # (cs_tile, ns_tile)

    # |a|^2 + |b|^2 via one tiny K=8 MXU contraction instead of two full-tile
    # broadcast adds:  extra_a = [|a|^2, 1, 0, ...],  extra_b = [1, |b|^2, 0, ...].
    a_sq = jnp.sum(a * a, axis=-1, keepdims=True)            # (cs_tile, 1) exact f32
    b_sq = jnp.sum(b * b, axis=-1, keepdims=True)            # (ns_tile, 1) exact f32
    lane_a = lax.broadcasted_iota(jnp.int32, (a.shape[0], 8), 1)
    lane_b = lax.broadcasted_iota(jnp.int32, (b.shape[0], 8), 1)
    extra_a = jnp.where(lane_a == 0, a_sq, jnp.where(lane_a == 1, 1.0, 0.0))
    extra_b = jnp.where(lane_b == 0, 1.0, jnp.where(lane_b == 1, b_sq, 0.0))
    norms = lax.dot_general(
        extra_a, extra_b,
        dimension_numbers=(((1,), (1,)), ((), ())),
        precision=lax.Precision.HIGHEST,
        preferred_element_type=jnp.float32)                  # (cs_tile, ns_tile)

    sq = jnp.maximum(norms + cross, 1e-30)                   # clamp_min_(1e-30)
    o_ref[...] = (gamma - jnp.sqrt(sq)).astype(o_ref.dtype)


def _transe_neg_score(chunk_emb, rel_emb, neg_emb, num_chunks, chunk_size,
                      neg_sample_size, *, gamma, rel_sign,
                      cs_tile, ns_tile, out_dtype):
    D = chunk_emb.shape[1]
    c = chunk_emb.reshape(num_chunks, chunk_size, D)
    r = rel_emb.reshape(num_chunks, chunk_size, D)
    n = neg_emb.reshape(num_chunks, neg_sample_size, D)

    cs_tile = min(cs_tile, chunk_size)
    ns_tile = min(ns_tile, neg_sample_size)
    # v7x: if a single block would cover everything and num_chunks == 1, split the
    # larger axis so the all-"parallel" grid has >= 2 steps for the 2 TensorCores.
    if num_chunks == 1 and cs_tile == chunk_size and ns_tile == neg_sample_size:
        if neg_sample_size >= 256:
            ns_tile = pl.cdiv(neg_sample_size, 2)
        elif chunk_size >= 16:
            cs_tile = pl.cdiv(chunk_size, 2)
    # Alignment: full-extent blocks are always legal; partial blocks must be x8
    # (chunk rows -> sublanes) / x128 (negatives -> lanes, unmasked dense stores).
    if cs_tile < chunk_size:
        cs_tile = _round_up(cs_tile, 8)
    if ns_tile < neg_sample_size:
        ns_tile = _round_up(ns_tile, 128)

    grid = (num_chunks,
            pl.cdiv(chunk_size, cs_tile),
            pl.cdiv(neg_sample_size, ns_tile))

    kernel = functools.partial(_neg_l2_kernel, gamma=gamma, rel_sign=rel_sign)
    return pl.pallas_call(
        kernel,
        out_shape=jax.ShapeDtypeStruct(
            (num_chunks, chunk_size, neg_sample_size), out_dtype),
        grid_spec=pltpu.PrefetchScalarGridSpec(
            num_scalar_prefetch=0,
            grid=grid,
            in_specs=[
                pl.BlockSpec((None, cs_tile, D), lambda c, i, j: (c, i, 0)),
                pl.BlockSpec((None, cs_tile, D), lambda c, i, j: (c, i, 0)),
                pl.BlockSpec((None, ns_tile, D), lambda c, i, j: (c, j, 0)),
            ],
            out_specs=pl.BlockSpec((None, cs_tile, ns_tile),
                                   lambda c, i, j: (c, i, j)),
        ),
        compiler_params=pltpu.CompilerParams(
            dimension_semantics=("parallel", "parallel", "parallel")),
    )(c, r, n)


def transe_neg_tail_score(heads, relations, tails, num_chunks, chunk_size,
                          neg_sample_size, *, gamma, cs_tile=512, ns_tile=2048,
                          out_dtype=jnp.float32):
    # create_neg(neg_head=False): chunks are heads+relations, negatives are tails.
    return _transe_neg_score(heads, relations, tails, num_chunks, chunk_size,
                             neg_sample_size, gamma=gamma, rel_sign=1,
                             cs_tile=cs_tile, ns_tile=ns_tile, out_dtype=out_dtype)


def transe_neg_head_score(heads, relations, tails, num_chunks, chunk_size,
                          neg_sample_size, *, gamma, cs_tile=512, ns_tile=2048,
                          out_dtype=jnp.float32):
    # create_neg(neg_head=True): chunks are tails-relations, negatives are heads.
    return _transe_neg_score(tails, relations, heads, num_chunks, chunk_size,
                             neg_sample_size, gamma=gamma, rel_sign=-1,
                             cs_tile=cs_tile, ns_tile=ns_tile, out_dtype=out_dtype)


# ---------------------------------------------------------------------------
# Pure-JAX references for verification
# ---------------------------------------------------------------------------
def _ref_edge(head, rel, tail, gamma, dist_ord):
    diff = head + rel - tail
    if dist_ord == 1:
        return gamma - jnp.sum(jnp.abs(diff), axis=-1)
    return gamma - jnp.sqrt(jnp.sum(diff * diff, axis=-1))


def _ref_batched_l2(a, b, gamma):
    a_sq = jnp.sum(a * a, axis=-1)[..., :, None]
    b_sq = jnp.sum(b * b, axis=-1)[..., None, :]
    cross = jnp.einsum("cid,cjd->cij", a, b)
    sq = jnp.maximum(a_sq + b_sq - 2.0 * cross, 1e-30)
    return gamma - jnp.sqrt(sq)


def _ref_neg_tail(heads, relations, tails, nc, cs, ns, gamma):
    D = heads.shape[1]
    return _ref_batched_l2((heads + relations).reshape(nc, cs, D),
                           tails.reshape(nc, ns, D), gamma)


def _ref_neg_head(heads, relations, tails, nc, cs, ns, gamma):
    D = heads.shape[1]
    return _ref_batched_l2((tails - relations).reshape(nc, cs, D),
                           heads.reshape(nc, ns, D), gamma)


if __name__ == "__main__":
    gamma = 12.0
    E, D = 1024, 32                    # edges, hidden_dim
    num_chunks, chunk_size, neg_sample_size = 2, 16, 32

    key = jax.random.PRNGKey(0)
    k1, k2, k3, k4, k5, k6 = jax.random.split(key, 6)
    head = jax.random.normal(k1, (E, D), jnp.float32)
    rel = jax.random.normal(k2, (E, D), jnp.float32)
    tail = jax.random.normal(k3, (E, D), jnp.float32)

    heads_n = jax.random.normal(k4, (num_chunks * chunk_size, D), jnp.float32)
    rels_n = jax.random.normal(k5, (num_chunks * chunk_size, D), jnp.float32)
    tails_n = jax.random.normal(k6, (num_chunks * neg_sample_size, D), jnp.float32)

    # edge_func path (forward of TransEScore), l2
    s_l2 = jax.block_until_ready(
        transe_edge_score(head, rel, tail, gamma=gamma, dist_ord=2))
    np.testing.assert_allclose(
        np.asarray(s_l2), np.asarray(_ref_edge(head, rel, tail, gamma, 2)),
        rtol=1e-5, atol=1e-4)

    # edge_func path, l1
    s_l1 = jax.block_until_ready(
        transe_edge_score(head, rel, tail, gamma=gamma, dist_ord=1))
    np.testing.assert_allclose(
        np.asarray(s_l1), np.asarray(_ref_edge(head, rel, tail, gamma, 1)),
        rtol=1e-5, atol=1e-4)

    # edge_func with E not a tile multiple (uneven grid, no padding copies)
    E_odd = 1000
    s_odd = jax.block_until_ready(
        transe_edge_score(head[:E_odd], rel[:E_odd], tail[:E_odd],
                          gamma=gamma, dist_ord=2))
    np.testing.assert_allclose(
        np.asarray(s_odd),
        np.asarray(_ref_edge(head[:E_odd], rel[:E_odd], tail[:E_odd], gamma, 2)),
        rtol=1e-5, atol=1e-4)

    # create_neg(neg_head=False) path, l2
    nt = jax.block_until_ready(
        transe_neg_tail_score(heads_n, rels_n, tails_n, num_chunks,
                              chunk_size, neg_sample_size, gamma=gamma))
    np.testing.assert_allclose(
        np.asarray(nt),
        np.asarray(_ref_neg_tail(heads_n, rels_n, tails_n, num_chunks,
                                 chunk_size, neg_sample_size, gamma)),
        rtol=1e-4, atol=1e-4)

    # create_neg(neg_head=True) path, l2 (heads play the negative role)
    nh = jax.block_until_ready(
        transe_neg_head_score(tails_n, rels_n, heads_n, num_chunks,
                              chunk_size, neg_sample_size, gamma=gamma))
    np.testing.assert_allclose(
        np.asarray(nh),
        np.asarray(_ref_neg_head(tails_n, rels_n, heads_n, num_chunks,
                                 chunk_size, neg_sample_size, gamma)),
        rtol=1e-4, atol=1e-4)

    # TODO(synk): batched_l1_dist (th.cdist p=1) for the neg-sampling l1 variant is an
    # all-pairs |a_i - b_j| reduction with no matmul form; not implemented here.
    # TODO(synk): infer() all-pairs (head x rel x tail) scoring is not exercised by
    # forward() and is not implemented.
    print("KERNEL_OK")
</pallas_src>

<mosaic_0001>
module attributes {stable_mosaic.version = 11 : i64} {
  func.func @_edge_score_kernel(%arg0: i32, %arg1: memref<512x32xf32, #tpu.memory_space<vmem>>, %arg2: memref<512x32xf32, #tpu.memory_space<vmem>>, %arg3: memref<512x32xf32, #tpu.memory_space<vmem>>, %arg4: memref<1x1x512xf32, #tpu.memory_space<vmem>>) attributes {dimension_semantics = [#tpu.dimension_semantics<parallel>], iteration_bounds = array<i64: 2>, scalar_prefetch = 0 : i64, scratch_operands = 0 : i64, tpu.core_type = #tpu.core_type<tc>, window_params = [{transform_indices = @transform_0, window_bounds = array<i64: 512, 32>}, {transform_indices = @transform_1, window_bounds = array<i64: 512, 32>}, {transform_indices = @transform_2, window_bounds = array<i64: 512, 32>}, {transform_indices = @transform_3, window_bounds = array<i64: 1, 1, 512>}]} {
    %c0 = arith.constant 0 : index
    %c0_0 = arith.constant 0 : index
    %0 = vector.load %arg1[%c0, %c0_0] : memref<512x32xf32, #tpu.memory_space<vmem>>, vector<512x32xf32>
    %c0_1 = arith.constant 0 : index
    %c0_2 = arith.constant 0 : index
    %1 = vector.load %arg2[%c0_1, %c0_2] : memref<512x32xf32, #tpu.memory_space<vmem>>, vector<512x32xf32>
    %2 = arith.addf %0, %1 : vector<512x32xf32>
    %c0_3 = arith.constant 0 : index
    %c0_4 = arith.constant 0 : index
    %3 = vector.load %arg3[%c0_3, %c0_4] : memref<512x32xf32, #tpu.memory_space<vmem>>, vector<512x32xf32>
    %4 = arith.subf %2, %3 : vector<512x32xf32>
    %5 = arith.mulf %4, %4 : vector<512x32xf32>
    %cst = arith.constant 1.000000e+00 : f32
    %6 = vector.broadcast %cst : f32 to vector<8x32xf32>
    %cst_5 = arith.constant dense<0.000000e+00> : vector<8x512xf32>
    %7 = tpu.matmul %6, %5, %cst_5 {dimension_numbers = #tpu.dot_dimension_numbers<[1], [1], [0], [0], [0, 0, 1, 0], [], []>, precision = #tpu.contract_precision<fp32>} : vector<8x32xf32>, vector<512x32xf32>, vector<8x512xf32> -> vector<8x512xf32>
    %8 = vector.extract_strided_slice %7 {offsets = [0, 0], sizes = [1, 512], strides = [1, 1]} : vector<8x512xf32> to vector<1x512xf32>
    %9 = math.sqrt %8 : vector<1x512xf32>
    %cst_6 = arith.constant 1.200000e+01 : f32
    %10 = vector.broadcast %cst_6 : f32 to vector<1x512xf32>
    %11 = arith.subf %10, %9 : vector<1x512xf32>
    %c0_7 = arith.constant 0 : index
    %c0_8 = arith.constant 0 : index
    %c0_9 = arith.constant 0 : index
    %12 = vector.load %arg4[%c0_7, %c0_8, %c0_9] : memref<1x1x512xf32, #tpu.memory_space<vmem>>, vector<1x1x512xf32>
    %13 = vector.shape_cast %12 : vector<1x1x512xf32> to vector<1x512xf32>
    %14 = vector.shape_cast %11 : vector<1x512xf32> to vector<1x1x512xf32>
    tpu.vector_store %arg4[%c0_7, %c0_8, %c0_9], %14 {strides = array<i32>} : memref<1x1x512xf32, #tpu.memory_space<vmem>>, vector<1x1x512xf32>,
    return
  }
  func.func @transform_0(%arg0: i32) -> (i32, i32) {
    %c0_i32 = arith.constant 0 : i32
    %c0_i32_0 = arith.constant 0 : i32
    return %arg0, %c0_i32 : i32, i32
  }
  func.func @transform_1(%arg0: i32) -> (i32, i32) {
    %c0_i32 = arith.constant 0 : i32
    %c0_i32_0 = arith.constant 0 : i32
    return %arg0, %c0_i32 : i32, i32
  }
  func.func @transform_2(%arg0: i32) -> (i32, i32) {
    %c0_i32 = arith.constant 0 : i32
    %c0_i32_0 = arith.constant 0 : i32
    return %arg0, %c0_i32 : i32, i32
  }
  func.func @transform_3(%arg0: i32) -> (i32, i32, i32) {
    %c0_i32 = arith.constant 0 : i32
    %c0_i32_0 = arith.constant 0 : i32
    %c0_i32_1 = arith.constant 0 : i32
    return %arg0, %c0_i32, %c0_i32_0 : i32, i32, i32
  }
}

</mosaic_0001>

<llo_original>
// kernel: tpu_custom_call.1
$region0: #{tpu_custom_call.1}
  #allocation0 [shape = 'u32[]', space=smem, size = 0x4, offset = 0x4, fixed_abs, tag = 'smem constant byte address 0x4 - core index']
  #allocation1 [shape = 'u32[144,128]{1,0:T(1,128)}', space=vmem, size = 0x12000, scoped, tag = 'internal scratch']
  %s0 = inlined_call_operand.vmem [shape: f32[1024,32], index: 0, kind: input, shape index: {}]
  %s1 = inlined_call_operand.vmem [shape: f32[1024,32], index: 1, kind: input, shape index: {}]
  %s2 = inlined_call_operand.vmem [shape: f32[1024,32], index: 2, kind: input, shape index: {}]
  %s3 = inlined_call_operand.hbm [shape: f32[2,1,512], index: 3, kind: output, shape index: {}]
  %s4 = sld [smem:[#allocation0]]
  $region45: #{tpu_custom_call.1} parent=0
    _
  %s6 = ssub.s32 1, %s4
  %s7 = scalar_select 0, %s6, %s4
  $region1: #{tpu_custom_call.1} parent=0
    #allocation2 [shape = 'u8[4096]{0}', space=vmem, size = 0x1000, scoped, tag = 'output window, operand 0']
    #allocation3 [shape = 's32[2]{0}', space=sflag, size = 0x8, scoped, tag = 'scoped memory for tpu_custom_call.1']
    %8 = vsyncpa [#allocation3], 0
    %s9 = scalar_lea.sflag [#allocation3], 1
    %10 = vsyncpa %s9, 0
    loop: start=0, step=1, limit=4
    $region2: #{tpu_custom_call.1} parent=1 // loop_pre_header
      _
    $region3: #{tpu_custom_call.1} parent=1 // loop_header
      %s12 = sphi 0, %s16
      %p13 = scmp.ge.s32.totalorder %s12, 4
      %s22 = sphi 0, %s24
      %s25 = sphi 0, %s22
      %s26 = sphi 0, %s25
      %s42 = sphi 0, %s26
      %s48 = sphi 0, %s50
      %s51 = sphi 0, %s48
      %s52 = sphi 0, %s51
      %s68 = sphi 0, %s52
      %s74 = sphi 0, %s76
      %s77 = sphi 0, %s74
      %s78 = sphi 0, %s77
      %s94 = sphi 0, %s78
      %s100 = sphi 0, %s102
      %s103 = sphi 0, %s100
      %s104 = sphi 0, %s103
      %s120 = sphi 0, %s104
    $region4: #{tpu_custom_call.1} parent=1 // loop_header_branch
      %15 = sbr.rel (%p13) target = $region8
    $region5: #{tpu_custom_call.1} parent=1 // loop_body
      %s17 = ssub.s32 %s12, 1
      %s18 = ssub.s32 %s12, 2
      %s19 = sadd.s32 %s12, 1
      %s20 = ssub.s32 %s12, %s19
      %p21 = scmp.eq.s32.totalorder %s20, 0
      %s23 = sadd.s32 %s22, 1
      %s24 = scalar_select %p21, %s22, %s23
      %p27 = pneg %p21
      %p28 = scmp.eq.s32.totalorder %s12, 1
      %p29 = por %p27, %p28
      %p30 = scmp.ne.s32.totalorder %s22, %s25
      %p31 = scmp.eq.s32.totalorder %s12, 0
      %p32 = por %p30, %p31
      %p33 = scmp.ne.s32.totalorder %s22, %s25
      %p34 = scmp.eq.s32.totalorder %s17, 1
      %p35 = por %p33, %p34
      %p36 = scmp.ne.s32.totalorder %s25, %s26
      %p37 = scmp.eq.s32.totalorder %s17, 0
      %p38 = por %p36, %p37
      %p39 = scmp.ne.s32.totalorder %s25, %s26
      %p40 = scmp.eq.s32.totalorder %s18, 1
      %p41 = por %p39, %p40
      %p43 = scmp.ne.s32.totalorder %s26, %s42
      %p44 = scmp.eq.s32.totalorder %s18, 0
      %p45 = por %p43, %p44
      %s46 = ssub.s32 %s12, %s19
      %p47 = scmp.eq.s32.totalorder %s46, 0
      %s49 = sadd.s32 %s48, 1
      %s50 = scalar_select %p47, %s48, %s49
      %p53 = pneg %p47
      %p54 = scmp.eq.s32.totalorder %s12, 1
      %p55 = por %p53, %p54
      %p56 = scmp.ne.s32.totalorder %s48, %s51
      %p57 = scmp.eq.s32.totalorder %s12, 0
      %p58 = por %p56, %p57
      %p59 = scmp.ne.s32.totalorder %s48, %s51
      %p60 = scmp.eq.s32.totalorder %s17, 1
      %p61 = por %p59, %p60
      %p62 = scmp.ne.s32.totalorder %s51, %s52
      %p63 = scmp.eq.s32.totalorder %s17, 0
      %p64 = por %p62, %p63
      %p65 = scmp.ne.s32.totalorder %s51, %s52
      %p66 = scmp.eq.s32.totalorder %s18, 1
      %p67 = por %p65, %p66
      %p69 = scmp.ne.s32.totalorder %s52, %s68
      %p70 = scmp.eq.s32.totalorder %s18, 0
      %p71 = por %p69, %p70
      %s72 = ssub.s32 %s12, %s19
      %p73 = scmp.eq.s32.totalorder %s72, 0
      %s75 = sadd.s32 %s74, 1
      %s76 = scalar_select %p73, %s74, %s75
      %p79 = pneg %p73
      %p80 = scmp.eq.s32.totalorder %s12, 1
      %p81 = por %p79, %p80
      %p82 = scmp.ne.s32.totalorder %s74, %s77
      %p83 = scmp.eq.s32.totalorder %s12, 0
      %p84 = por %p82, %p83
      %p85 = scmp.ne.s32.totalorder %s74, %s77
      %p86 = scmp.eq.s32.totalorder %s17, 1
      %p87 = por %p85, %p86
      %p88 = scmp.ne.s32.totalorder %s77, %s78
      %p89 = scmp.eq.s32.totalorder %s17, 0
      %p90 = por %p88, %p89
      %p91 = scmp.ne.s32.totalorder %s77, %s78
      %p92 = scmp.eq.s32.totalorder %s18, 1
      %p93 = por %p91, %p92
      %p95 = scmp.ne.s32.totalorder %s78, %s94
      %p96 = scmp.eq.s32.totalorder %s18, 0
      %p97 = por %p95, %p96
      %s98 = ssub.s32 %s12, %s19
      %p99 = scmp.eq.s32.totalorder %s98, 0
      %s101 = sadd.s32 %s100, 1
      %s102 = scalar_select %p99, %s100, %s101
      %p105 = pneg %p99
      %p106 = scmp.eq.s32.totalorder %s12, 1
      %p107 = por %p105, %p106
      %p108 = scmp.ne.s32.totalorder %s100, %s103
      %p109 = scmp.eq.s32.totalorder %s12, 0
      %p110 = por %p108, %p109
      %p111 = scmp.ne.s32.totalorder %s100, %s103
      %p112 = scmp.eq.s32.totalorder %s17, 1
      %p113 = por %p111, %p112
      %p114 = scmp.ne.s32.totalorder %s103, %s104
      %p115 = scmp.eq.s32.totalorder %s17, 0
      %p116 = por %p114, %p115
      %p117 = scmp.ne.s32.totalorder %s103, %s104
      %p118 = scmp.eq.s32.totalorder %s18, 1
      %p119 = por %p117, %p118
      %p121 = scmp.ne.s32.totalorder %s104, %s120
      %p122 = scmp.eq.s32.totalorder %s18, 0
      %p123 = por %p121, %p122
      %p124 = scmp.le.s32.totalorder 1, %s12
      %p125 = scmp.lt.s32.totalorder %s12, 3
      %p126 = pnand %p124, %p125
      %p127 = pneg %p126
      // Predicated region
      $region9: #{tpu_custom_call.1} parent=5 // pred_check
        _
      $region10: #{tpu_custom_call.1} parent=5 // pred_check_branch
        %129 = sbr.rel (%p126) target = $region12
      $region11: #{tpu_custom_call.1} parent=5 // pred_region
        %s130 = ssub.s32 %s12, 1
      $region12: #{tpu_custom_call.1} parent=5 // pred_fallthru
        _
      %p131 = scmp.lt.s32.totalorder %s12, 2
      // Predicated region
      $region13: #{tpu_custom_call.1} parent=5 // pred_check
        %p132 = pneg %p131
      $region14: #{tpu_custom_call.1} parent=5 // pred_check_branch
        %134 = sbr.rel (%p132) target = $region16
      $region15: #{tpu_custom_call.1} parent=5 // pred_region
        // Predicated region
        $region17: #{tpu_custom_call.1} parent=15 // pred_check
          %p135 = pneg %p32
        $region18: #{tpu_custom_call.1} parent=15 // pred_check_branch
          %137 = sbr.rel (%p135) target = $region20
        $region19: #{tpu_custom_call.1} parent=15 // pred_region
          %s138 = smul.u32 64, %s12
          %p139 = scmp.lt.s32.totalorder %s138, 127
          %s140 = scalar_select %p139, %s138, 127
          %s141 = smul.addr %s140, 8
          %s142 = scalar_lea.vmem %s0, %s141
          %s143 = smul.u32 64, %s12
        $region20: #{tpu_custom_call.1} parent=15 // pred_fallthru
          _
        // Predicated region
        $region21: #{tpu_custom_call.1} parent=15 // pred_check
          %p144 = pneg %p58
        $region22: #{tpu_custom_call.1} parent=15 // pred_check_branch
          %146 = sbr.rel (%p144) target = $region24
        $region23: #{tpu_custom_call.1} parent=15 // pred_region
          %s147 = smul.u32 64, %s12
          %p148 = scmp.lt.s32.totalorder %s147, 127
          %s149 = scalar_select %p148, %s147, 127
          %s150 = smul.addr %s149, 8
          %s151 = scalar_lea.vmem %s1, %s150
          %s152 = smul.u32 64, %s12
        $region24: #{tpu_custom_call.1} parent=15 // pred_fallthru
          _
        // Predicated region
        $region25: #{tpu_custom_call.1} parent=15 // pred_check
          %p153 = pneg %p84
        $region26: #{tpu_custom_call.1} parent=15 // pred_check_branch
          %155 = sbr.rel (%p153) target = $region28
        $region27: #{tpu_custom_call.1} parent=15 // pred_region
          %s156 = smul.u32 64, %s12
          %p157 = scmp.lt.s32.totalorder %s156, 127
          %s158 = scalar_select %p157, %s156, 127
          %s159 = smul.addr %s158, 8
          %s160 = scalar_lea.vmem %s2, %s159
          %s161 = smul.u32 64, %s12
        $region28: #{tpu_custom_call.1} parent=15 // pred_fallthru
          _
      $region16: #{tpu_custom_call.1} parent=5 // pred_fallthru
        _
      %p162 = scmp.le.s32.totalorder 1, %s12
      %p163 = scmp.lt.s32.totalorder %s12, 3
      %p164 = pnand %p162, %p163
      %p165 = pneg %p164
      // Predicated region
      $region29: #{tpu_custom_call.1} parent=5 // pred_check
        _
      $region30: #{tpu_custom_call.1} parent=5 // pred_check_branch
        %167 = sbr.rel (%p164) target = $region32
      $region31: #{tpu_custom_call.1} parent=5 // pred_region
        %s168 = ssub.s32 %s12, 1
        %s169 = smul.u32 64, %s17
        %p170 = scmp.lt.s32.totalorder %s169, 127
        %s171 = scalar_select %p170, %s169, 127
        %s172 = smul.addr %s171, 8
        %s173 = scalar_lea.vmem %s0, %s172
        %p174 = pneg %p38
        %p175 = pneg %p35
        %s176 = smul.u32 64, %s17
        %p177 = scmp.lt.s32.totalorder %s176, 127
        %s178 = scalar_select %p177, %s176, 127
        %s179 = smul.addr %s178, 8
        %s180 = scalar_lea.vmem %s1, %s179
        %p181 = pneg %p64
        %p182 = pneg %p61
        %s183 = smul.u32 64, %s17
        %p184 = scmp.lt.s32.totalorder %s183, 127
        %s185 = scalar_select %p184, %s183, 127
        %s186 = smul.addr %s185, 8
        %s187 = scalar_lea.vmem %s2, %s186
        %p188 = pneg %p90
        %p189 = pneg %p87
        %p190 = pneg %p116
        %p191 = pneg %p113
        %s192 = sand.u32 %s103, 1
        %s193 = scalar_lea.sflag [#allocation3], %s192
        %s194 = sand.u32 %s103, 1
        %s195 = smul.addr %s194, 4
        %s196 = scalar_lea.vmem [#allocation2], %s195
        %s197 = smul.u32 64, %s17
        %p198 = scmp.lt.s32.totalorder %s197, 127
        %s199 = scalar_select %p198, %s197, 127
        %s200 = smul.addr %s199, 8
        %s201 = scalar_lea.vmem %s0, %s200
        %s202 = smul.u32 64, %s17
        %s203 = smul.u32 64, %s17
        %p204 = scmp.lt.s32.totalorder %s203, 127
        %s205 = scalar_select %p204, %s203, 127
        %s206 = smul.addr %s205, 8
        %s207 = scalar_lea.vmem %s1, %s206
        %s208 = smul.u32 64, %s17
        %s209 = smul.u32 64, %s17
        %p210 = scmp.lt.s32.totalorder %s209, 127
        %s211 = scalar_select %p210, %s209, 127
        %s212 = smul.addr %s211, 8
        %s213 = scalar_lea.vmem %s2, %s212
        %s214 = smul.u32 64, %s17
        %v215 = vld [vmem:[%s201] sm:$0xff]
        %v216 = vld [vmem:[%s201 + $0x8] sm:$0xff]
        %v217 = vld [vmem:[%s201 + $0x10] sm:$0xff]
        %v218 = vld [vmem:[%s201 + $0x18] sm:$0xff]
        %v219 = vld [vmem:[%s201 + $0x20] sm:$0xff]
        %v220 = vld [vmem:[%s201 + $0x28] sm:$0xff]
        %v221 = vld [vmem:[%s201 + $0x30] sm:$0xff]
        %v222 = vld [vmem:[%s201 + $0x38] sm:$0xff]
        %v223 = vld [vmem:[%s201 + $0x40] sm:$0xff]
        %v224 = vld [vmem:[%s201 + $0x48] sm:$0xff]
        %v225 = vld [vmem:[%s201 + $0x50] sm:$0xff]
        %v226 = vld [vmem:[%s201 + $0x58] sm:$0xff]
        %v227 = vld [vmem:[%s201 + $0x60] sm:$0xff]
        %v228 = vld [vmem:[%s201 + $0x68] sm:$0xff]
        %v229 = vld [vmem:[%s201 + $0x70] sm:$0xff]
        %v230 = vld [vmem:[%s201 + $0x78] sm:$0xff]
        %v231 = vld [vmem:[%s201 + $0x80] sm:$0xff]
        %v232 = vld [vmem:[%s201 + $0x88] sm:$0xff]
        %v233 = vld [vmem:[%s201 + $0x90] sm:$0xff]
        %v234 = vld [vmem:[%s201 + $0x98] sm:$0xff]
        %v235 = vld [vmem:[%s201 + $0xa0] sm:$0xff]
        %v236 = vld [vmem:[%s201 + $0xa8] sm:$0xff]
        %v237 = vld [vmem:[%s201 + $0xb0] sm:$0xff]
        %v238 = vld [vmem:[%s201 + $0xb8] sm:$0xff]
        %v239 = vld [vmem:[%s201 + $0xc0] sm:$0xff]
        %v240 = vld [vmem:[%s201 + $0xc8] sm:$0xff]
        %v241 = vld [vmem:[%s201 + $0xd0] sm:$0xff]
        %v242 = vld [vmem:[%s201 + $0xd8] sm:$0xff]
        %v243 = vld [vmem:[%s201 + $0xe0] sm:$0xff]
        %v244 = vld [vmem:[%s201 + $0xe8] sm:$0xff]
        %v245 = vld [vmem:[%s201 + $0xf0] sm:$0xff]
        %v246 = vld [vmem:[%s201 + $0xf8] sm:$0xff]
        %v247 = vld [vmem:[%s201 + $0x100] sm:$0xff]
        %v248 = vld [vmem:[%s201 + $0x108] sm:$0xff]
        %v249 = vld [vmem:[%s201 + $0x110] sm:$0xff]
        %v250 = vld [vmem:[%s201 + $0x118] sm:$0xff]
        %v251 = vld [vmem:[%s201 + $0x120] sm:$0xff]
        %v252 = vld [vmem:[%s201 + $0x128] sm:$0xff]
        %v253 = vld [vmem:[%s201 + $0x130] sm:$0xff]
        %v254 = vld [vmem:[%s201 + $0x138] sm:$0xff]
        %v255 = vld [vmem:[%s201 + $0x140] sm:$0xff]
        %v256 = vld [vmem:[%s201 + $0x148] sm:$0xff]
        %v257 = vld [vmem:[%s201 + $0x150] sm:$0xff]
        %v258 = vld [vmem:[%s201 + $0x158] sm:$0xff]
        %v259 = vld [vmem:[%s201 + $0x160] sm:$0xff]
        %v260 = vld [vmem:[%s201 + $0x168] sm:$0xff]
        %v261 = vld [vmem:[%s201 + $0x170] sm:$0xff]
        %v262 = vld [vmem:[%s201 + $0x178] sm:$0xff]
        %v263 = vld [vmem:[%s201 + $0x180] sm:$0xff]
        %v264 = vld [vmem:[%s201 + $0x188] sm:$0xff]
        %v265 = vld [vmem:[%s201 + $0x190] sm:$0xff]
        %v266 = vld [vmem:[%s201 + $0x198] sm:$0xff]
        %v267 = vld [vmem:[%s201 + $0x1a0] sm:$0xff]
        %v268 = vld [vmem:[%s201 + $0x1a8] sm:$0xff]
        %v269 = vld [vmem:[%s201 + $0x1b0] sm:$0xff]
        %v270 = vld [vmem:[%s201 + $0x1b8] sm:$0xff]
        %v271 = vld [vmem:[%s201 + $0x1c0] sm:$0xff]
        %v272 = vld [vmem:[%s201 + $0x1c8] sm:$0xff]
        %v273 = vld [vmem:[%s201 + $0x1d0] sm:$0xff]
        %v274 = vld [vmem:[%s201 + $0x1d8] sm:$0xff]
        %v275 = vld [vmem:[%s201 + $0x1e0] sm:$0xff]
        %v276 = vld [vmem:[%s201 + $0x1e8] sm:$0xff]
        %v277 = vld [vmem:[%s201 + $0x1f0] sm:$0xff]
        %v278 = vld [vmem:[%s201 + $0x1f8] sm:$0xff]
        %v279 = vld [vmem:[%s207] sm:$0xff]
        %v280 = vld [vmem:[%s207 + $0x8] sm:$0xff]
        %v281 = vld [vmem:[%s207 + $0x10] sm:$0xff]
        %v282 = vld [vmem:[%s207 + $0x18] sm:$0xff]
        %v283 = vld [vmem:[%s207 + $0x20] sm:$0xff]
        %v284 = vld [vmem:[%s207 + $0x28] sm:$0xff]
        %v285 = vld [vmem:[%s207 + $0x30] sm:$0xff]
        %v286 = vld [vmem:[%s207 + $0x38] sm:$0xff]
        %v287 = vld [vmem:[%s207 + $0x40] sm:$0xff]
        %v288 = vld [vmem:[%s207 + $0x48] sm:$0xff]
        %v289 = vld [vmem:[%s207 + $0x50] sm:$0xff]
        %v290 = vld [vmem:[%s207 + $0x58] sm:$0xff]
        %v291 = vld [vmem:[%s207 + $0x60] sm:$0xff]
        %v292 = vld [vmem:[%s207 + $0x68] sm:$0xff]
        %v293 = vld [vmem:[%s207 + $0x70] sm:$0xff]
        %v294 = vld [vmem:[%s207 + $0x78] sm:$0xff]
        %v295 = vld [vmem:[%s207 + $0x80] sm:$0xff]
        %v296 = vld [vmem:[%s207 + $0x88] sm:$0xff]
        %v297 = vld [vmem:[%s207 + $0x90] sm:$0xff]
        %v298 = vld [vmem:[%s207 + $0x98] sm:$0xff]
        %v299 = vld [vmem:[%s207 + $0xa0] sm:$0xff]
        %v300 = vld [vmem:[%s207 + $0xa8] sm:$0xff]
        %v301 = vld [vmem:[%s207 + $0xb0] sm:$0xff]
        %v302 = vld [vmem:[%s207 + $0xb8] sm:$0xff]
        %v303 = vld [vmem:[%s207 + $0xc0] sm:$0xff]
        %v304 = vld [vmem:[%s207 + $0xc8] sm:$0xff]
        %v305 = vld [vmem:[%s207 + $0xd0] sm:$0xff]
        %v306 = vld [vmem:[%s207 + $0xd8] sm:$0xff]
        %v307 = vld [vmem:[%s207 + $0xe0] sm:$0xff]
        %v308 = vld [vmem:[%s207 + $0xe8] sm:$0xff]
        %v309 = vld [vmem:[%s207 + $0xf0] sm:$0xff]
        %v310 = vld [vmem:[%s207 + $0xf8] sm:$0xff]
        %v311 = vld [vmem:[%s207 + $0x100] sm:$0xff]
        %v312 = vld [vmem:[%s207 + $0x108] sm:$0xff]
        %v313 = vld [vmem:[%s207 + $0x110] sm:$0xff]
        %v314 = vld [vmem:[%s207 + $0x118] sm:$0xff]
        %v315 = vld [vmem:[%s207 + $0x120] sm:$0xff]
        %v316 = vld [vmem:[%s207 + $0x128] sm:$0xff]
        %v317 = vld [vmem:[%s207 + $0x130] sm:$0xff]
        %v318 = vld [vmem:[%s207 + $0x138] sm:$0xff]
        %v319 = vld [vmem:[%s207 + $0x140] sm:$0xff]
        %v320 = vld [vmem:[%s207 + $0x148] sm:$0xff]
        %v321 = vld [vmem:[%s207 + $0x150] sm:$0xff]
        %v322 = vld [vmem:[%s207 + $0x158] sm:$0xff]
        %v323 = vld [vmem:[%s207 + $0x160] sm:$0xff]
        %v324 = vld [vmem:[%s207 + $0x168] sm:$0xff]
        %v325 = vld [vmem:[%s207 + $0x170] sm:$0xff]
        %v326 = vld [vmem:[%s207 + $0x178] sm:$0xff]
        %v327 = vld [vmem:[%s207 + $0x180] sm:$0xff]
        %v328 = vld [vmem:[%s207 + $0x188] sm:$0xff]
        %v329 = vld [vmem:[%s207 + $0x190] sm:$0xff]
        %v330 = vld [vmem:[%s207 + $0x198] sm:$0xff]
        %v331 = vld [vmem:[%s207 + $0x1a0] sm:$0xff]
        %v332 = vld [vmem:[%s207 + $0x1a8] sm:$0xff]
        %v333 = vld [vmem:[%s207 + $0x1b0] sm:$0xff]
        %v334 = vld [vmem:[%s207 + $0x1b8] sm:$0xff]
        %v335 = vld [vmem:[%s207 + $0x1c0] sm:$0xff]
        %v336 = vld [vmem:[%s207 + $0x1c8] sm:$0xff]
        %v337 = vld [vmem:[%s207 + $0x1d0] sm:$0xff]
        %v338 = vld [vmem:[%s207 + $0x1d8] sm:$0xff]
        %v339 = vld [vmem:[%s207 + $0x1e0] sm:$0xff]
        %v340 = vld [vmem:[%s207 + $0x1e8] sm:$0xff]
        %v341 = vld [vmem:[%s207 + $0x1f0] sm:$0xff]
        %v342 = vld [vmem:[%s207 + $0x1f8] sm:$0xff]
        %v343 = vadd.f32 %v215, %v279
        %v344 = vadd.f32 %v216, %v280
        %v345 = vadd.f32 %v217, %v281
        %v346 = vadd.f32 %v218, %v282
        %v347 = vadd.f32 %v219, %v283
        %v348 = vadd.f32 %v220, %v284
        %v349 = vadd.f32 %v221, %v285
        %v350 = vadd.f32 %v222, %v286
        %v351 = vadd.f32 %v223, %v287
        %v352 = vadd.f32 %v224, %v288
        %v353 = vadd.f32 %v225, %v289
        %v354 = vadd.f32 %v226, %v290
        %v355 = vadd.f32 %v227, %v291
        %v356 = vadd.f32 %v228, %v292
        %v357 = vadd.f32 %v229, %v293
        %v358 = vadd.f32 %v230, %v294
        %v359 = vadd.f32 %v231, %v295
        %v360 = vadd.f32 %v232, %v296
        %v361 = vadd.f32 %v233, %v297
        %v362 = vadd.f32 %v234, %v298
        %v363 = vadd.f32 %v235, %v299
        %v364 = vadd.f32 %v236, %v300
        %v365 = vadd.f32 %v237, %v301
        %v366 = vadd.f32 %v238, %v302
        %v367 = vadd.f32 %v239, %v303
        %v368 = vadd.f32 %v240, %v304
        %v369 = vadd.f32 %v241, %v305
        %v370 = vadd.f32 %v242, %v306
        %v371 = vadd.f32 %v243, %v307
        %v372 = vadd.f32 %v244, %v308
        %v373 = vadd.f32 %v245, %v309
        %v374 = vadd.f32 %v246, %v310
        %v375 = vadd.f32 %v247, %v311
        %v376 = vadd.f32 %v248, %v312
        %v377 = vadd.f32 %v249, %v313
        %v378 = vadd.f32 %v250, %v314
        %v379 = vadd.f32 %v251, %v315
        %v380 = vadd.f32 %v252, %v316
        %v381 = vadd.f32 %v253, %v317
        %v382 = vadd.f32 %v254, %v318
        %v383 = vadd.f32 %v255, %v319
        %v384 = vadd.f32 %v256, %v320
        %v385 = vadd.f32 %v257, %v321
        %v386 = vadd.f32 %v258, %v322
        %v387 = vadd.f32 %v259, %v323
        %v388 = vadd.f32 %v260, %v324
        %v389 = vadd.f32 %v261, %v325
        %v390 = vadd.f32 %v262, %v326
        %v391 = vadd.f32 %v263, %v327
        %v392 = vadd.f32 %v264, %v328
        %v393 = vadd.f32 %v265, %v329
        %v394 = vadd.f32 %v266, %v330
        %v395 = vadd.f32 %v267, %v331
        %v396 = vadd.f32 %v268, %v332
        %v397 = vadd.f32 %v269, %v333
        %v398 = vadd.f32 %v270, %v334
        %v399 = vadd.f32 %v271, %v335
        %v400 = vadd.f32 %v272, %v336
        %v401 = vadd.f32 %v273, %v337
        %v402 = vadd.f32 %v274, %v338
        %v403 = vadd.f32 %v275, %v339
        %v404 = vadd.f32 %v276, %v340
        %v405 = vadd.f32 %v277, %v341
        %v406 = vadd.f32 %v278, %v342
        %v407 = vld [vmem:[%s213] sm:$0xff]
        %v408 = vld [vmem:[%s213 + $0x8] sm:$0xff]
        %v409 = vld [vmem:[%s213 + $0x10] sm:$0xff]
        %v410 = vld [vmem:[%s213 + $0x18] sm:$0xff]
        %v411 = vld [vmem:[%s213 + $0x20] sm:$0xff]
        %v412 = vld [vmem:[%s213 + $0x28] sm:$0xff]
        %v413 = vld [vmem:[%s213 + $0x30] sm:$0xff]
        %v414 = vld [vmem:[%s213 + $0x38] sm:$0xff]
        %v415 = vld [vmem:[%s213 + $0x40] sm:$0xff]
        %v416 = vld [vmem:[%s213 + $0x48] sm:$0xff]
        %v417 = vld [vmem:[%s213 + $0x50] sm:$0xff]
        %v418 = vld [vmem:[%s213 + $0x58] sm:$0xff]
        %v419 = vld [vmem:[%s213 + $0x60] sm:$0xff]
        %v420 = vld [vmem:[%s213 + $0x68] sm:$0xff]
        %v421 = vld [vmem:[%s213 + $0x70] sm:$0xff]
        %v422 = vld [vmem:[%s213 + $0x78] sm:$0xff]
        %v423 = vld [vmem:[%s213 + $0x80] sm:$0xff]
        %v424 = vld [vmem:[%s213 + $0x88] sm:$0xff]
        %v425 = vld [vmem:[%s213 + $0x90] sm:$0xff]
        %v426 = vld [vmem:[%s213 + $0x98] sm:$0xff]
        %v427 = vld [vmem:[%s213 + $0xa0] sm:$0xff]
        %v428 = vld [vmem:[%s213 + $0xa8] sm:$0xff]
        %v429 = vld [vmem:[%s213 + $0xb0] sm:$0xff]
        %v430 = vld [vmem:[%s213 + $0xb8] sm:$0xff]
        %v431 = vld [vmem:[%s213 + $0xc0] sm:$0xff]
        %v432 = vld [vmem:[%s213 + $0xc8] sm:$0xff]
        %v433 = vld [vmem:[%s213 + $0xd0] sm:$0xff]
        %v434 = vld [vmem:[%s213 + $0xd8] sm:$0xff]
        %v435 = vld [vmem:[%s213 + $0xe0] sm:$0xff]
        %v436 = vld [vmem:[%s213 + $0xe8] sm:$0xff]
        %v437 = vld [vmem:[%s213 + $0xf0] sm:$0xff]
        %v438 = vld [vmem:[%s213 + $0xf8] sm:$0xff]
        %v439 = vld [vmem:[%s213 + $0x100] sm:$0xff]
        %v440 = vld [vmem:[%s213 + $0x108] sm:$0xff]
        %v441 = vld [vmem:[%s213 + $0x110] sm:$0xff]
        %v442 = vld [vmem:[%s213 + $0x118] sm:$0xff]
        %v443 = vld [vmem:[%s213 + $0x120] sm:$0xff]
        %v444 = vld [vmem:[%s213 + $0x128] sm:$0xff]
        %v445 = vld [vmem:[%s213 + $0x130] sm:$0xff]
        %v446 = vld [vmem:[%s213 + $0x138] sm:$0xff]
        %v447 = vld [vmem:[%s213 + $0x140] sm:$0xff]
        %v448 = vld [vmem:[%s213 + $0x148] sm:$0xff]
        %v449 = vld [vmem:[%s213 + $0x150] sm:$0xff]
        %v450 = vld [vmem:[%s213 + $0x158] sm:$0xff]
        %v451 = vld [vmem:[%s213 + $0x160] sm:$0xff]
        %v452 = vld [vmem:[%s213 + $0x168] sm:$0xff]
        %v453 = vld [vmem:[%s213 + $0x170] sm:$0xff]
        %v454 = vld [vmem:[%s213 + $0x178] sm:$0xff]
        %v455 = vld [vmem:[%s213 + $0x180] sm:$0xff]
        %v456 = vld [vmem:[%s213 + $0x188] sm:$0xff]
        %v457 = vld [vmem:[%s213 + $0x190] sm:$0xff]
        %v458 = vld [vmem:[%s213 + $0x198] sm:$0xff]
        %v459 = vld [vmem:[%s213 + $0x1a0] sm:$0xff]
        %v460 = vld [vmem:[%s213 + $0x1a8] sm:$0xff]
        %v461 = vld [vmem:[%s213 + $0x1b0] sm:$0xff]
        %v462 = vld [vmem:[%s213 + $0x1b8] sm:$0xff]
        %v463 = vld [vmem:[%s213 + $0x1c0] sm:$0xff]
        %v464 = vld [vmem:[%s213 + $0x1c8] sm:$0xff]
        %v465 = vld [vmem:[%s213 + $0x1d0] sm:$0xff]
        %v466 = vld [vmem:[%s213 + $0x1d8] sm:$0xff]
        %v467 = vld [vmem:[%s213 + $0x1e0] sm:$0xff]
        %v468 = vld [vmem:[%s213 + $0x1e8] sm:$0xff]
        %v469 = vld [vmem:[%s213 + $0x1f0] sm:$0xff]
        %v470 = vld [vmem:[%s213 + $0x1f8] sm:$0xff]
        %v471 = vsub.f32 %v343, %v407
        %v472 = vsub.f32 %v344, %v408
        %v473 = vsub.f32 %v345, %v409
        %v474 = vsub.f32 %v346, %v410
        %v475 = vsub.f32 %v347, %v411
        %v476 = vsub.f32 %v348, %v412
        %v477 = vsub.f32 %v349, %v413
        %v478 = vsub.f32 %v350, %v414
        %v479 = vsub.f32 %v351, %v415
        %v480 = vsub.f32 %v352, %v416
        %v481 = vsub.f32 %v353, %v417
        %v482 = vsub.f32 %v354, %v418
        %v483 = vsub.f32 %v355, %v419
        %v484 = vsub.f32 %v356, %v420
        %v485 = vsub.f32 %v357, %v421
        %v486 = vsub.f32 %v358, %v422
        %v487 = vsub.f32 %v359, %v423
        %v488 = vsub.f32 %v360, %v424
        %v489 = vsub.f32 %v361, %v425
        %v490 = vsub.f32 %v362, %v426
        %v491 = vsub.f32 %v363, %v427
        %v492 = vsub.f32 %v364, %v428
        %v493 = vsub.f32 %v365, %v429
        %v494 = vsub.f32 %v366, %v430
        %v495 = vsub.f32 %v367, %v431
        %v496 = vsub.f32 %v368, %v432
        %v497 = vsub.f32 %v369, %v433
        %v498 = vsub.f32 %v370, %v434
        %v499 = vsub.f32 %v371, %v435
        %v500 = vsub.f32 %v372, %v436
        %v501 = vsub.f32 %v373, %v437
        %v502 = vsub.f32 %v374, %v438
        %v503 = vsub.f32 %v375, %v439
        %v504 = vsub.f32 %v376, %v440
        %v505 = vsub.f32 %v377, %v441
        %v506 = vsub.f32 %v378, %v442
        %v507 = vsub.f32 %v379, %v443
        %v508 = vsub.f32 %v380, %v444
        %v509 = vsub.f32 %v381, %v445
        %v510 = vsub.f32 %v382, %v446
        %v511 = vsub.f32 %v383, %v447
        %v512 = vsub.f32 %v384, %v448
        %v513 = vsub.f32 %v385, %v449
        %v514 = vsub.f32 %v386, %v450
        %v515 = vsub.f32 %v387, %v451
        %v516 = vsub.f32 %v388, %v452
        %v517 = vsub.f32 %v389, %v453
        %v518 = vsub.f32 %v390, %v454
        %v519 = vsub.f32 %v391, %v455
        %v520 = vsub.f32 %v392, %v456
        %v521 = vsub.f32 %v393, %v457
        %v522 = vsub.f32 %v394, %v458
        %v523 = vsub.f32 %v395, %v459
        %v524 = vsub.f32 %v396, %v460
        %v525 = vsub.f32 %v397, %v461
        %v526 = vsub.f32 %v398, %v462
        %v527 = vsub.f32 %v399, %v463
        %v528 = vsub.f32 %v400, %v464
        %v529 = vsub.f32 %v401, %v465
        %v530 = vsub.f32 %v402, %v466
        %v531 = vsub.f32 %v403, %v467
        %v532 = vsub.f32 %v404, %v468
        %v533 = vsub.f32 %v405, %v469
        %v534 = vsub.f32 %v406, %v470
        %v535 = vmul.f32 %v471, %v471
        %v536 = vmul.f32 %v472, %v472
        %v537 = vmul.f32 %v473, %v473
        %v538 = vmul.f32 %v474, %v474
        %v539 = vmul.f32 %v475, %v475
        %v540 = vmul.f32 %v476, %v476
        %v541 = vmul.f32 %v477, %v477
        %v542 = vmul.f32 %v478, %v478
        %v543 = vmul.f32 %v479, %v479
        %v544 = vmul.f32 %v480, %v480
        %v545 = vmul.f32 %v481, %v481
        %v546 = vmul.f32 %v482, %v482
        %v547 = vmul.f32 %v483, %v483
        %v548 = vmul.f32 %v484, %v484
        %v549 = vmul.f32 %v485, %v485
        %v550 = vmul.f32 %v486, %v486
        %v551 = vmul.f32 %v487, %v487
        %v552 = vmul.f32 %v488, %v488
        %v553 = vmul.f32 %v489, %v489
        %v554 = vmul.f32 %v490, %v490
        %v555 = vmul.f32 %v491, %v491
        %v556 = vmul.f32 %v492, %v492
        %v557 = vmul.f32 %v493, %v493
        %v558 = vmul.f32 %v494, %v494
        %v559 = vmul.f32 %v495, %v495
        %v560 = vmul.f32 %v496, %v496
        %v561 = vmul.f32 %v497, %v497
        %v562 = vmul.f32 %v498, %v498
        %v563 = vmul.f32 %v499, %v499
        %v564 = vmul.f32 %v500, %v500
        %v565 = vmul.f32 %v501, %v501
        %v566 = vmul.f32 %v502, %v502
        %v567 = vmul.f32 %v503, %v503
        %v568 = vmul.f32 %v504, %v504
        %v569 = vmul.f32 %v505, %v505
        %v570 = vmul.f32 %v506, %v506
        %v571 = vmul.f32 %v507, %v507
        %v572 = vmul.f32 %v508, %v508
        %v573 = vmul.f32 %v509, %v509
        %v574 = vmul.f32 %v510, %v510
        %v575 = vmul.f32 %v511, %v511
        %v576 = vmul.f32 %v512, %v512
        %v577 = vmul.f32 %v513, %v513
        %v578 = vmul.f32 %v514, %v514
        %v579 = vmul.f32 %v515, %v515
        %v580 = vmul.f32 %v516, %v516
        %v581 = vmul.f32 %v517, %v517
        %v582 = vmul.f32 %v518, %v518
        %v583 = vmul.f32 %v519, %v519
        %v584 = vmul.f32 %v520, %v520
        %v585 = vmul.f32 %v521, %v521
        %v586 = vmul.f32 %v522, %v522
        %v587 = vmul.f32 %v523, %v523
        %v588 = vmul.f32 %v524, %v524
        %v589 = vmul.f32 %v525, %v525
        %v590 = vmul.f32 %v526, %v526
        %v591 = vmul.f32 %v527, %v527
        %v592 = vmul.f32 %v528, %v528
        %v593 = vmul.f32 %v529, %v529
        %v594 = vmul.f32 %v530, %v530
        %v595 = vmul.f32 %v531, %v531
        %v596 = vmul.f32 %v532, %v532
        %v597 = vmul.f32 %v533, %v533
        %v598 = vmul.f32 %v534, %v534
        %vm599 = vcmask 261120
        %v601 = vsel %vm599, 1.0, 0
        %v604 = vsel %vm599, %v535, 0
        %v607 = vsel %vm599, %v536, 0
        %v610 = vsel %vm599, %v537, 0
        %v613 = vsel %vm599, %v538, 0
        %v616 = vsel %vm599, %v539, 0
        %v619 = vsel %vm599, %v540, 0
        %v622 = vsel %vm599, %v541, 0
        %v625 = vsel %vm599, %v542, 0
        %v628 = vsel %vm599, %v543, 0
        %v631 = vsel %vm599, %v544, 0
        %v634 = vsel %vm599, %v545, 0
        %v637 = vsel %vm599, %v546, 0
        %v640 = vsel %vm599, %v547, 0
        %v643 = vsel %vm599, %v548, 0
        %v646 = vsel %vm599, %v549, 0
        %v649 = vsel %vm599, %v550, 0
        %v652 = vsel %vm599, %v551, 0
        %v655 = vsel %vm599, %v552, 0
        %v658 = vsel %vm599, %v553, 0
        %v661 = vsel %vm599, %v554, 0
        %v664 = vsel %vm599, %v555, 0
        %v667 = vsel %vm599, %v556, 0
        %v670 = vsel %vm599, %v557, 0
        %v673 = vsel %vm599, %v558, 0
        %v676 = vsel %vm599, %v559, 0
        %v679 = vsel %vm599, %v560, 0
        %v682 = vsel %vm599, %v561, 0
        %v685 = vsel %vm599, %v562, 0
        %v688 = vsel %vm599, %v563, 0
        %v691 = vsel %vm599, %v564, 0
        %v694 = vsel %vm599, %v565, 0
        %v697 = vsel %vm599, %v566, 0
        %v700 = vsel %vm599, %v567, 0
        %v703 = vsel %vm599, %v568, 0
        %v706 = vsel %vm599, %v569, 0
        %v709 = vsel %vm599, %v570, 0
        %v712 = vsel %vm599, %v571, 0
        %v715 = vsel %vm599, %v572, 0
        %v718 = vsel %vm599, %v573, 0
        %v721 = vsel %vm599, %v574, 0
        %v724 = vsel %vm599, %v575, 0
        %v727 = vsel %vm599, %v576, 0
        %v730 = vsel %vm599, %v577, 0
        %v733 = vsel %vm599, %v578, 0
        %v736 = vsel %vm599, %v579, 0
        %v739 = vsel %vm599, %v580, 0
        %v742 = vsel %vm599, %v581, 0
        %v745 = vsel %vm599, %v582, 0
        %v748 = vsel %vm599, %v583, 0
        %v751 = vsel %vm599, %v584, 0
        %v754 = vsel %vm599, %v585, 0
        %v757 = vsel %vm599, %v586, 0
        %v760 = vsel %vm599, %v587, 0
        %v763 = vsel %vm599, %v588, 0
        %v766 = vsel %vm599, %v589, 0
        %v769 = vsel %vm599, %v590, 0
        %v772 = vsel %vm599, %v591, 0
        %v775 = vsel %vm599, %v592, 0
        %v778 = vsel %vm599, %v593, 0
        %v781 = vsel %vm599, %v594, 0
        %v784 = vsel %vm599, %v595, 0
        %v787 = vsel %vm599, %v596, 0
        %v790 = vsel %vm599, %v597, 0
        %v793 = vsel %vm599, %v598, 0
        %795 = vmatprep.subr.mxu0 0.0
        %v796 = vand.u32 %v604, 4294901760
        %797 = vmatpush1.xpose.msra.mxu0 %v796
        %798 = vmatprep.subr.mxu0 0.0
        %v799 = vand.u32 %v607, 4294901760
        %800 = vmatpush1.xpose.msra.mxu0 %v799
        %801 = vmatprep.subr.mxu0 0.0
        %v802 = vand.u32 %v610, 4294901760
        %803 = vmatpush1.xpose.msra.mxu0 %v802
        %804 = vmatprep.subr.mxu0 0.0
        %v805 = vand.u32 %v613, 4294901760
        %806 = vmatpush1.xpose.msra.mxu0 %v805
        %807 = vmatprep.subr.mxu0 0.0
        %v808 = vand.u32 %v616, 4294901760
        %809 = vmatpush1.xpose.msra.mxu0 %v808
        %810 = vmatprep.subr.mxu0 0.0
        %v811 = vand.u32 %v619, 4294901760
        %812 = vmatpush1.xpose.msra.mxu0 %v811
        %813 = vmatprep.subr.mxu0 0.0
        %v814 = vand.u32 %v622, 4294901760
        %815 = vmatpush1.xpose.msra.mxu0 %v814
        %816 = vmatprep.subr.mxu0 0.0
        %v817 = vand.u32 %v625, 4294901760
        %818 = vmatpush1.xpose.msra.mxu0 %v817
        %819 = vmatprep.subr.mxu0 0.0
        %v820 = vand.u32 %v628, 4294901760
        %821 = vmatpush1.xpose.msra.mxu0 %v820
        %822 = vmatprep.subr.mxu0 0.0
        %v823 = vand.u32 %v631, 4294901760
        %824 = vmatpush1.xpose.msra.mxu0 %v823
        %825 = vmatprep.subr.mxu0 0.0
        %v826 = vand.u32 %v634, 4294901760
        %827 = vmatpush1.xpose.msra.mxu0 %v826
        %828 = vmatprep.subr.mxu0 0.0
        %v829 = vand.u32 %v637, 4294901760
        %830 = vmatpush1.xpose.msra.mxu0 %v829
        %831 = vmatprep.subr.mxu0 0.0
        %v832 = vand.u32 %v640, 4294901760
        %833 = vmatpush1.xpose.msra.mxu0 %v832
        %834 = vmatprep.subr.mxu0 0.0
        %v835 = vand.u32 %v643, 4294901760
        %836 = vmatpush1.xpose.msra.mxu0 %v835
        %837 = vmatprep.subr.mxu0 0.0
        %v838 = vand.u32 %v646, 4294901760
        %839 = vmatpush1.xpose.msra.mxu0 %v838
        %840 = vmatprep.subr.mxu0 0.0
        %v841 = vand.u32 %v649, 4294901760
        %842 = vmatpush1.xpose.msra.mxu0 %v841
        %843 = vmatprep.subr.mxu0 0.0
        %v844 = vand.u32 %v652, 4294901760
        %845 = vmatpush1.xpose.msra.mxu0 %v844
        %846 = vmatprep.subr.mxu0 0.0
        %v847 = vand.u32 %v655, 4294901760
        %848 = vmatpush1.xpose.msra.mxu0 %v847
        %849 = vmatprep.subr.mxu0 0.0
        %v850 = vand.u32 %v658, 4294901760
        %851 = vmatpush1.xpose.msra.mxu0 %v850
        %852 = vmatprep.subr.mxu0 0.0
        %v853 = vand.u32 %v661, 4294901760
        %854 = vmatpush1.xpose.msra.mxu0 %v853
        %855 = vmatprep.subr.mxu0 0.0
        %v856 = vand.u32 %v664, 4294901760
        %857 = vmatpush1.xpose.msra.mxu0 %v856
        %858 = vmatprep.subr.mxu0 0.0
        %v859 = vand.u32 %v667, 4294901760
        %860 = vmatpush1.xpose.msra.mxu0 %v859
        %861 = vmatprep.subr.mxu0 0.0
        %v862 = vand.u32 %v670, 4294901760
        %863 = vmatpush1.xpose.msra.mxu0 %v862
        %864 = vmatprep.subr.mxu0 0.0
        %v865 = vand.u32 %v673, 4294901760
        %866 = vmatpush1.xpose.msra.mxu0 %v865
        %867 = vmatprep.subr.mxu0 0.0
        %v868 = vand.u32 %v676, 4294901760
        %869 = vmatpush1.xpose.msra.mxu0 %v868
        %870 = vmatprep.subr.mxu0 0.0
        %v871 = vand.u32 %v679, 4294901760
        %872 = vmatpush1.xpose.msra.mxu0 %v871
        %873 = vmatprep.subr.mxu0 0.0
        %v874 = vand.u32 %v682, 4294901760
        %875 = vmatpush1.xpose.msra.mxu0 %v874
        %876 = vmatprep.subr.mxu0 0.0
        %v877 = vand.u32 %v685, 4294901760
        %878 = vmatpush1.xpose.msra.mxu0 %v877
        %879 = vmatprep.subr.mxu0 0.0
        %v880 = vand.u32 %v688, 4294901760
        %881 = vmatpush1.xpose.msra.mxu0 %v880
        %882 = vmatprep.subr.mxu0 0.0
        %v883 = vand.u32 %v691, 4294901760
        %884 = vmatpush1.xpose.msra.mxu0 %v883
        %885 = vmatprep.subr.mxu0 0.0
        %v886 = vand.u32 %v694, 4294901760
        %887 = vmatpush1.xpose.msra.mxu0 %v886
        %888 = vmatprep.subr.mxu0 0.0
        %v889 = vand.u32 %v697, 4294901760
        %890 = vmatpush1.xpose.msra.mxu0 %v889
        %891 = vmatprep.mubr.f32.mxu0 0.0
        %v892 = vand.u32 %v601, 4294901760
        %v893 = vsub.f32 %v601, %v892
        %v894 = vand.u32 %v893, 4294901760
        %v895 = vsub.f32 %v893, %v894
        %v896 = vand.u32 %v895, 4294901760
        %897 = vmatmul.mubr.f32.gmra.mrb[0].mxu0 %v896
        %v898 = vpop.f32.mrb[0].mxu0
        %v899 = vadd.f32 0.0, %v898
        %v900 = vpop.f32.mrb[0].mxu0
        %v901 = vadd.f32 0.0, %v900
        %902 = vdwg.mxu0
        %903 = vmatprep.subr.mxu0 0.0
        %v904 = vand.u32 %v604, 4294901760
        %v905 = vsub.f32 %v604, %v904
        %v906 = vand.u32 %v905, 4294901760
        %v907 = vsub.f32 %v905, %v906
        %v908 = vand.u32 %v907, 4294901760
        %909 = vmatpush1.xpose.msra.mxu0 %v908
        %910 = vmatprep.subr.mxu0 0.0
        %v911 = vand.u32 %v607, 4294901760
        %v912 = vsub.f32 %v607, %v911
        %v913 = vand.u32 %v912, 4294901760
        %v914 = vsub.f32 %v912, %v913
        %v915 = vand.u32 %v914, 4294901760
        %916 = vmatpush1.xpose.msra.mxu0 %v915
        %917 = vmatprep.subr.mxu0 0.0
        %v918 = vand.u32 %v610, 4294901760
        %v919 = vsub.f32 %v610, %v918
        %v920 = vand.u32 %v919, 4294901760
        %v921 = vsub.f32 %v919, %v920
        %v922 = vand.u32 %v921, 4294901760
        %923 = vmatpush1.xpose.msra.mxu0 %v922
        %924 = vmatprep.subr.mxu0 0.0
        %v925 = vand.u32 %v613, 4294901760
        %v926 = vsub.f32 %v613, %v925
        %v927 = vand.u32 %v926, 4294901760
        %v928 = vsub.f32 %v926, %v927
        %v929 = vand.u32 %v928, 4294901760
        %930 = vmatpush1.xpose.msra.mxu0 %v929
        %931 = vmatprep.subr.mxu0 0.0
        %v932 = vand.u32 %v616, 4294901760
        %v933 = vsub.f32 %v616, %v932
        %v934 = vand.u32 %v933, 4294901760
        %v935 = vsub.f32 %v933, %v934
        %v936 = vand.u32 %v935, 4294901760
        %937 = vmatpush1.xpose.msra.mxu0 %v936
        %938 = vmatprep.subr.mxu0 0.0
        %v939 = vand.u32 %v619, 4294901760
        %v940 = vsub.f32 %v619, %v939
        %v941 = vand.u32 %v940, 4294901760
        %v942 = vsub.f32 %v940, %v941
        %v943 = vand.u32 %v942, 4294901760
        %944 = vmatpush1.xpose.msra.mxu0 %v943
        %945 = vmatprep.subr.mxu0 0.0
        %v946 = vand.u32 %v622, 4294901760
        %v947 = vsub.f32 %v622, %v946
        %v948 = vand.u32 %v947, 4294901760
        %v949 = vsub.f32 %v947, %v948
        %v950 = vand.u32 %v949, 4294901760
        %951 = vmatpush1.xpose.msra.mxu0 %v950
        %952 = vmatprep.subr.mxu0 0.0
        %v953 = vand.u32 %v625, 4294901760
        %v954 = vsub.f32 %v625, %v953
        %v955 = vand.u32 %v954, 4294901760
        %v956 = vsub.f32 %v954, %v955
        %v957 = vand.u32 %v956, 4294901760
        %958 = vmatpush1.xpose.msra.mxu0 %v957
        %959 = vmatprep.subr.mxu0 0.0
        %v960 = vand.u32 %v628, 4294901760
        %v961 = vsub.f32 %v628, %v960
        %v962 = vand.u32 %v961, 4294901760
        %v963 = vsub.f32 %v961, %v962
        %v964 = vand.u32 %v963, 4294901760
        %965 = vmatpush1.xpose.msra.mxu0 %v964
        %966 = vmatprep.subr.mxu0 0.0
        %v967 = vand.u32 %v631, 4294901760
        %v968 = vsub.f32 %v631, %v967
        %v969 = vand.u32 %v968, 4294901760
        %v970 = vsub.f32 %v968, %v969
        %v971 = vand.u32 %v970, 4294901760
        %972 = vmatpush1.xpose.msra.mxu0 %v971
        %973 = vmatprep.subr.mxu0 0.0
        %v974 = vand.u32 %v634, 4294901760
        %v975 = vsub.f32 %v634, %v974
        %v976 = vand.u32 %v975, 4294901760
        %v977 = vsub.f32 %v975, %v976
        %v978 = vand.u32 %v977, 4294901760
        %979 = vmatpush1.xpose.msra.mxu0 %v978
        %980 = vmatprep.subr.mxu0 0.0
        %v981 = vand.u32 %v637, 4294901760
        %v982 = vsub.f32 %v637, %v981
        %v983 = vand.u32 %v982, 4294901760
        %v984 = vsub.f32 %v982, %v983
        %v985 = vand.u32 %v984, 4294901760
        %986 = vmatpush1.xpose.msra.mxu0 %v985
        %987 = vmatprep.subr.mxu0 0.0
        %v988 = vand.u32 %v640, 4294901760
        %v989 = vsub.f32 %v640, %v988
        %v990 = vand.u32 %v989, 4294901760
        %v991 = vsub.f32 %v989, %v990
        %v992 = vand.u32 %v991, 4294901760
        %993 = vmatpush1.xpose.msra.mxu0 %v992
        %994 = vmatprep.subr.mxu0 0.0
        %v995 = vand.u32 %v643, 4294901760
        %v996 = vsub.f32 %v643, %v995
        %v997 = vand.u32 %v996, 4294901760
        %v998 = vsub.f32 %v996, %v997
        %v999 = vand.u32 %v998, 4294901760
        %1000 = vmatpush1.xpose.msra.mxu0 %v999
        %1001 = vmatprep.subr.mxu0 0.0
        %v1002 = vand.u32 %v646, 4294901760
        %v1003 = vsub.f32 %v646, %v1002
        %v1004 = vand.u32 %v1003, 4294901760
        %v1005 = vsub.f32 %v1003, %v1004
        %v1006 = vand.u32 %v1005, 4294901760
        %1007 = vmatpush1.xpose.msra.mxu0 %v1006
        %1008 = vmatprep.subr.mxu0 0.0
        %v1009 = vand.u32 %v649, 4294901760
        %v1010 = vsub.f32 %v649, %v1009
        %v1011 = vand.u32 %v1010, 4294901760
        %v1012 = vsub.f32 %v1010, %v1011
        %v1013 = vand.u32 %v1012, 4294901760
        %1014 = vmatpush1.xpose.msra.mxu0 %v1013
        %1015 = vmatprep.subr.mxu0 0.0
        %v1016 = vand.u32 %v652, 4294901760
        %v1017 = vsub.f32 %v652, %v1016
        %v1018 = vand.u32 %v1017, 4294901760
        %v1019 = vsub.f32 %v1017, %v1018
        %v1020 = vand.u32 %v1019, 4294901760
        %1021 = vmatpush1.xpose.msra.mxu0 %v1020
        %1022 = vmatprep.subr.mxu0 0.0
        %v1023 = vand.u32 %v655, 4294901760
        %v1024 = vsub.f32 %v655, %v1023
        %v1025 = vand.u32 %v1024, 4294901760
        %v1026 = vsub.f32 %v1024, %v1025
        %v1027 = vand.u32 %v1026, 4294901760
        %1028 = vmatpush1.xpose.msra.mxu0 %v1027
        %1029 = vmatprep.subr.mxu0 0.0
        %v1030 = vand.u32 %v658, 4294901760
        %v1031 = vsub.f32 %v658, %v1030
        %v1032 = vand.u32 %v1031, 4294901760
        %v1033 = vsub.f32 %v1031, %v1032
        %v1034 = vand.u32 %v1033, 4294901760
        %1035 = vmatpush1.xpose.msra.mxu0 %v1034
        %1036 = vmatprep.subr.mxu0 0.0
        %v1037 = vand.u32 %v661, 4294901760
        %v1038 = vsub.f32 %v661, %v1037
        %v1039 = vand.u32 %v1038, 4294901760
        %v1040 = vsub.f32 %v1038, %v1039
        %v1041 = vand.u32 %v1040, 4294901760
        %1042 = vmatpush1.xpose.msra.mxu0 %v1041
        %1043 = vmatprep.subr.mxu0 0.0
        %v1044 = vand.u32 %v664, 4294901760
        %v1045 = vsub.f32 %v664, %v1044
        %v1046 = vand.u32 %v1045, 4294901760
        %v1047 = vsub.f32 %v1045, %v1046
        %v1048 = vand.u32 %v1047, 4294901760
        %1049 = vmatpush1.xpose.msra.mxu0 %v1048
        %1050 = vmatprep.subr.mxu0 0.0
        %v1051 = vand.u32 %v667, 4294901760
        %v1052 = vsub.f32 %v667, %v1051
        %v1053 = vand.u32 %v1052, 4294901760
        %v1054 = vsub.f32 %v1052, %v1053
        %v1055 = vand.u32 %v1054, 4294901760
        %1056 = vmatpush1.xpose.msra.mxu0 %v1055
        %1057 = vmatprep.subr.mxu0 0.0
        %v1058 = vand.u32 %v670, 4294901760
        %v1059 = vsub.f32 %v670, %v1058
        %v1060 = vand.u32 %v1059, 4294901760
        %v1061 = vsub.f32 %v1059, %v1060
        %v1062 = vand.u32 %v1061, 4294901760
        %1063 = vmatpush1.xpose.msra.mxu0 %v1062
        %1064 = vmatprep.subr.mxu0 0.0
        %v1065 = vand.u32 %v673, 4294901760
        %v1066 = vsub.f32 %v673, %v1065
        %v1067 = vand.u32 %v1066, 4294901760
        %v1068 = vsub.f32 %v1066, %v1067
        %v1069 = vand.u32 %v1068, 4294901760
        %1070 = vmatpush1.xpose.msra.mxu0 %v1069
        %1071 = vmatprep.subr.mxu0 0.0
        %v1072 = vand.u32 %v676, 4294901760
        %v1073 = vsub.f32 %v676, %v1072
        %v1074 = vand.u32 %v1073, 4294901760
        %v1075 = vsub.f32 %v1073, %v1074
        %v1076 = vand.u32 %v1075, 4294901760
        %1077 = vmatpush1.xpose.msra.mxu0 %v1076
        %1078 = vmatprep.subr.mxu0 0.0
        %v1079 = vand.u32 %v679, 4294901760
        %v1080 = vsub.f32 %v679, %v1079
        %v1081 = vand.u32 %v1080, 4294901760
        %v1082 = vsub.f32 %v1080, %v1081
        %v1083 = vand.u32 %v1082, 4294901760
        %1084 = vmatpush1.xpose.msra.mxu0 %v1083
        %1085 = vmatprep.subr.mxu0 0.0
        %v1086 = vand.u32 %v682, 4294901760
        %v1087 = vsub.f32 %v682, %v1086
        %v1088 = vand.u32 %v1087, 4294901760
        %v1089 = vsub.f32 %v1087, %v1088
        %v1090 = vand.u32 %v1089, 4294901760
        %1091 = vmatpush1.xpose.msra.mxu0 %v1090
        %1092 = vmatprep.subr.mxu0 0.0
        %v1093 = vand.u32 %v685, 4294901760
        %v1094 = vsub.f32 %v685, %v1093
        %v1095 = vand.u32 %v1094, 4294901760
        %v1096 = vsub.f32 %v1094, %v1095
        %v1097 = vand.u32 %v1096, 4294901760
        %1098 = vmatpush1.xpose.msra.mxu0 %v1097
        %1099 = vmatprep.subr.mxu0 0.0
        %v1100 = vand.u32 %v688, 4294901760
        %v1101 = vsub.f32 %v688, %v1100
        %v1102 = vand.u32 %v1101, 4294901760
        %v1103 = vsub.f32 %v1101, %v1102
        %v1104 = vand.u32 %v1103, 4294901760
        %1105 = vmatpush1.xpose.msra.mxu0 %v1104
        %1106 = vmatprep.subr.mxu0 0.0
        %v1107 = vand.u32 %v691, 4294901760
        %v1108 = vsub.f32 %v691, %v1107
        %v1109 = vand.u32 %v1108, 4294901760
        %v1110 = vsub.f32 %v1108, %v1109
        %v1111 = vand.u32 %v1110, 4294901760
        %1112 = vmatpush1.xpose.msra.mxu0 %v1111
        %1113 = vmatprep.subr.mxu0 0.0
        %v1114 = vand.u32 %v694, 4294901760
        %v1115 = vsub.f32 %v694, %v1114
        %v1116 = vand.u32 %v1115, 4294901760
        %v1117 = vsub.f32 %v1115, %v1116
        %v1118 = vand.u32 %v1117, 4294901760
        %1119 = vmatpush1.xpose.msra.mxu0 %v1118
        %1120 = vmatprep.subr.mxu0 0.0
        %v1121 = vand.u32 %v697, 4294901760
        %v1122 = vsub.f32 %v697, %v1121
        %v1123 = vand.u32 %v1122, 4294901760
        %v1124 = vsub.f32 %v1122, %v1123
        %v1125 = vand.u32 %v1124, 4294901760
        %1126 = vmatpush1.xpose.msra.mxu0 %v1125
        %1127 = vmatprep.mubr.f32.mxu0 0.0
        %v1128 = vand.u32 %v601, 4294901760
        %1129 = vmatmul.mubr.f32.gmra.mrb[0].mxu0 %v1128
        %v1130 = vpop.f32.mrb[0].mxu0
        %v1131 = vadd.f32 %v899, %v1130
        %v1132 = vpop.f32.mrb[0].mxu0
        %v1133 = vadd.f32 %v901, %v1132
        %1134 = vdwg.mxu0
        %1135 = vmatprep.subr.mxu0 0.0
        %v1136 = vand.u32 %v604, 4294901760
        %v1137 = vsub.f32 %v604, %v1136
        %1138 = vmatpush1.xpose.msra.mxu0 %v1137
        %1139 = vmatprep.subr.mxu0 0.0
        %v1140 = vand.u32 %v607, 4294901760
        %v1141 = vsub.f32 %v607, %v1140
        %1142 = vmatpush1.xpose.msra.mxu0 %v1141
        %1143 = vmatprep.subr.mxu0 0.0
        %v1144 = vand.u32 %v610, 4294901760
        %v1145 = vsub.f32 %v610, %v1144
        %1146 = vmatpush1.xpose.msra.mxu0 %v1145
        %1147 = vmatprep.subr.mxu0 0.0
        %v1148 = vand.u32 %v613, 4294901760
        %v1149 = vsub.f32 %v613, %v1148
        %1150 = vmatpush1.xpose.msra.mxu0 %v1149
        %1151 = vmatprep.subr.mxu0 0.0
        %v1152 = vand.u32 %v616, 4294901760
        %v1153 = vsub.f32 %v616, %v1152
        %1154 = vmatpush1.xpose.msra.mxu0 %v1153
        %1155 = vmatprep.subr.mxu0 0.0
        %v1156 = vand.u32 %v619, 4294901760
        %v1157 = vsub.f32 %v619, %v1156
        %1158 = vmatpush1.xpose.msra.mxu0 %v1157
        %1159 = vmatprep.subr.mxu0 0.0
        %v1160 = vand.u32 %v622, 4294901760
        %v1161 = vsub.f32 %v622, %v1160
        %1162 = vmatpush1.xpose.msra.mxu0 %v1161
        %1163 = vmatprep.subr.mxu0 0.0
        %v1164 = vand.u32 %v625, 4294901760
        %v1165 = vsub.f32 %v625, %v1164
        %1166 = vmatpush1.xpose.msra.mxu0 %v1165
        %1167 = vmatprep.subr.mxu0 0.0
        %v1168 = vand.u32 %v628, 4294901760
        %v1169 = vsub.f32 %v628, %v1168
        %1170 = vmatpush1.xpose.msra.mxu0 %v1169
        %1171 = vmatprep.subr.mxu0 0.0
        %v1172 = vand.u32 %v631, 4294901760
        %v1173 = vsub.f32 %v631, %v1172
        %1174 = vmatpush1.xpose.msra.mxu0 %v1173
        %1175 = vmatprep.subr.mxu0 0.0
        %v1176 = vand.u32 %v634, 4294901760
        %v1177 = vsub.f32 %v634, %v1176
        %1178 = vmatpush1.xpose.msra.mxu0 %v1177
        %1179 = vmatprep.subr.mxu0 0.0
        %v1180 = vand.u32 %v637, 4294901760
        %v1181 = vsub.f32 %v637, %v1180
        %1182 = vmatpush1.xpose.msra.mxu0 %v1181
        %1183 = vmatprep.subr.mxu0 0.0
        %v1184 = vand.u32 %v640, 4294901760
        %v1185 = vsub.f32 %v640, %v1184
        %1186 = vmatpush1.xpose.msra.mxu0 %v1185
        %1187 = vmatprep.subr.mxu0 0.0
        %v1188 = vand.u32 %v643, 4294901760
        %v1189 = vsub.f32 %v643, %v1188
        %1190 = vmatpush1.xpose.msra.mxu0 %v1189
        %1191 = vmatprep.subr.mxu0 0.0
        %v1192 = vand.u32 %v646, 4294901760
        %v1193 = vsub.f32 %v646, %v1192
        %1194 = vmatpush1.xpose.msra.mxu0 %v1193
        %1195 = vmatprep.subr.mxu0 0.0
        %v1196 = vand.u32 %v649, 4294901760
        %v1197 = vsub.f32 %v649, %v1196
        %1198 = vmatpush1.xpose.msra.mxu0 %v1197
        %1199 = vmatprep.subr.mxu0 0.0
        %v1200 = vand.u32 %v652, 4294901760
        %v1201 = vsub.f32 %v652, %v1200
        %1202 = vmatpush1.xpose.msra.mxu0 %v1201
        %1203 = vmatprep.subr.mxu0 0.0
        %v1204 = vand.u32 %v655, 4294901760
        %v1205 = vsub.f32 %v655, %v1204
        %1206 = vmatpush1.xpose.msra.mxu0 %v1205
        %1207 = vmatprep.subr.mxu0 0.0
        %v1208 = vand.u32 %v658, 4294901760
        %v1209 = vsub.f32 %v658, %v1208
        %1210 = vmatpush1.xpose.msra.mxu0 %v1209
        %1211 = vmatprep.subr.mxu0 0.0
        %v1212 = vand.u32 %v661, 4294901760
        %v1213 = vsub.f32 %v661, %v1212
        %1214 = vmatpush1.xpose.msra.mxu0 %v1213
        %1215 = vmatprep.subr.mxu0 0.0
        %v1216 = vand.u32 %v664, 4294901760
        %v1217 = vsub.f32 %v664, %v1216
        %1218 = vmatpush1.xpose.msra.mxu0 %v1217
        %1219 = vmatprep.subr.mxu0 0.0
        %v1220 = vand.u32 %v667, 4294901760
        %v1221 = vsub.f32 %v667, %v1220
        %1222 = vmatpush1.xpose.msra.mxu0 %v1221
        %1223 = vmatprep.subr.mxu0 0.0
        %v1224 = vand.u32 %v670, 4294901760
        %v1225 = vsub.f32 %v670, %v1224
        %1226 = vmatpush1.xpose.msra.mxu0 %v1225
        %1227 = vmatprep.subr.mxu0 0.0
        %v1228 = vand.u32 %v673, 4294901760
        %v1229 = vsub.f32 %v673, %v1228
        %1230 = vmatpush1.xpose.msra.mxu0 %v1229
        %1231 = vmatprep.subr.mxu0 0.0
        %v1232 = vand.u32 %v676, 4294901760
        %v1233 = vsub.f32 %v676, %v1232
        %1234 = vmatpush1.xpose.msra.mxu0 %v1233
        %1235 = vmatprep.subr.mxu0 0.0
        %v1236 = vand.u32 %v679, 4294901760
        %v1237 = vsub.f32 %v679, %v1236
        %1238 = vmatpush1.xpose.msra.mxu0 %v1237
        %1239 = vmatprep.subr.mxu0 0.0
        %v1240 = vand.u32 %v682, 4294901760
        %v1241 = vsub.f32 %v682, %v1240
        %1242 = vmatpush1.xpose.msra.mxu0 %v1241
        %1243 = vmatprep.subr.mxu0 0.0
        %v1244 = vand.u32 %v685, 4294901760
        %v1245 = vsub.f32 %v685, %v1244
        %1246 = vmatpush1.xpose.msra.mxu0 %v1245
        %1247 = vmatprep.subr.mxu0 0.0
        %v1248 = vand.u32 %v688, 4294901760
        %v1249 = vsub.f32 %v688, %v1248
        %1250 = vmatpush1.xpose.msra.mxu0 %v1249
        %1251 = vmatprep.subr.mxu0 0.0
        %v1252 = vand.u32 %v691, 4294901760
        %v1253 = vsub.f32 %v691, %v1252
        %1254 = vmatpush1.xpose.msra.mxu0 %v1253
        %1255 = vmatprep.subr.mxu0 0.0
        %v1256 = vand.u32 %v694, 4294901760
        %v1257 = vsub.f32 %v694, %v1256
        %1258 = vmatpush1.xpose.msra.mxu0 %v1257
        %1259 = vmatprep.subr.mxu0 0.0
        %v1260 = vand.u32 %v697, 4294901760
        %v1261 = vsub.f32 %v697, %v1260
        %1262 = vmatpush1.xpose.msra.mxu0 %v1261
        %1263 = vmatprep.mubr.f32.mxu0 0.0
        %v1264 = vand.u32 %v601, 4294901760
        %v1265 = vsub.f32 %v601, %v1264
        %1266 = vmatmul.mubr.f32.gmra.mrb[0].mxu0 %v1265
        %v1267 = vpop.f32.mrb[0].mxu0
        %v1268 = vadd.f32 %v1131, %v1267
        %v1269 = vpop.f32.mrb[0].mxu0
        %v1270 = vadd.f32 %v1133, %v1269
        %1271 = vdwg.mxu0
        %1272 = vmatprep.subr.mxu0 0.0
        %v1273 = vand.u32 %v604, 4294901760
        %1274 = vmatpush1.xpose.msra.mxu0 %v1273
        %1275 = vmatprep.subr.mxu0 0.0
        %v1276 = vand.u32 %v607, 4294901760
        %1277 = vmatpush1.xpose.msra.mxu0 %v1276
        %1278 = vmatprep.subr.mxu0 0.0
        %v1279 = vand.u32 %v610, 4294901760
        %1280 = vmatpush1.xpose.msra.mxu0 %v1279
        %1281 = vmatprep.subr.mxu0 0.0
        %v1282 = vand.u32 %v613, 4294901760
        %1283 = vmatpush1.xpose.msra.mxu0 %v1282
        %1284 = vmatprep.subr.mxu0 0.0
        %v1285 = vand.u32 %v616, 4294901760
        %1286 = vmatpush1.xpose.msra.mxu0 %v1285
        %1287 = vmatprep.subr.mxu0 0.0
        %v1288 = vand.u32 %v619, 4294901760
        %1289 = vmatpush1.xpose.msra.mxu0 %v1288
        %1290 = vmatprep.subr.mxu0 0.0
        %v1291 = vand.u32 %v622, 4294901760
        %1292 = vmatpush1.xpose.msra.mxu0 %v1291
        %1293 = vmatprep.subr.mxu0 0.0
        %v1294 = vand.u32 %v625, 4294901760
        %1295 = vmatpush1.xpose.msra.mxu0 %v1294
        %1296 = vmatprep.subr.mxu0 0.0
        %v1297 = vand.u32 %v628, 4294901760
        %1298 = vmatpush1.xpose.msra.mxu0 %v1297
        %1299 = vmatprep.subr.mxu0 0.0
        %v1300 = vand.u32 %v631, 4294901760
        %1301 = vmatpush1.xpose.msra.mxu0 %v1300
        %1302 = vmatprep.subr.mxu0 0.0
        %v1303 = vand.u32 %v634, 4294901760
        %1304 = vmatpush1.xpose.msra.mxu0 %v1303
        %1305 = vmatprep.subr.mxu0 0.0
        %v1306 = vand.u32 %v637, 4294901760
        %1307 = vmatpush1.xpose.msra.mxu0 %v1306
        %1308 = vmatprep.subr.mxu0 0.0
        %v1309 = vand.u32 %v640, 4294901760
        %1310 = vmatpush1.xpose.msra.mxu0 %v1309
        %1311 = vmatprep.subr.mxu0 0.0
        %v1312 = vand.u32 %v643, 4294901760
        %1313 = vmatpush1.xpose.msra.mxu0 %v1312
        %1314 = vmatprep.subr.mxu0 0.0
        %v1315 = vand.u32 %v646, 4294901760
        %1316 = vmatpush1.xpose.msra.mxu0 %v1315
        %1317 = vmatprep.subr.mxu0 0.0
        %v1318 = vand.u32 %v649, 4294901760
        %1319 = vmatpush1.xpose.msra.mxu0 %v1318
        %1320 = vmatprep.subr.mxu0 0.0
        %v1321 = vand.u32 %v652, 4294901760
        %1322 = vmatpush1.xpose.msra.mxu0 %v1321
        %1323 = vmatprep.subr.mxu0 0.0
        %v1324 = vand.u32 %v655, 4294901760
        %1325 = vmatpush1.xpose.msra.mxu0 %v1324
        %1326 = vmatprep.subr.mxu0 0.0
        %v1327 = vand.u32 %v658, 4294901760
        %1328 = vmatpush1.xpose.msra.mxu0 %v1327
        %1329 = vmatprep.subr.mxu0 0.0
        %v1330 = vand.u32 %v661, 4294901760
        %1331 = vmatpush1.xpose.msra.mxu0 %v1330
        %1332 = vmatprep.subr.mxu0 0.0
        %v1333 = vand.u32 %v664, 4294901760
        %1334 = vmatpush1.xpose.msra.mxu0 %v1333
        %1335 = vmatprep.subr.mxu0 0.0
        %v1336 = vand.u32 %v667, 4294901760
        %1337 = vmatpush1.xpose.msra.mxu0 %v1336
        %1338 = vmatprep.subr.mxu0 0.0
        %v1339 = vand.u32 %v670, 4294901760
        %1340 = vmatpush1.xpose.msra.mxu0 %v1339
        %1341 = vmatprep.subr.mxu0 0.0
        %v1342 = vand.u32 %v673, 4294901760
        %1343 = vmatpush1.xpose.msra.mxu0 %v1342
        %1344 = vmatprep.subr.mxu0 0.0
        %v1345 = vand.u32 %v676, 4294901760
        %1346 = vmatpush1.xpose.msra.mxu0 %v1345
        %1347 = vmatprep.subr.mxu0 0.0
        %v1348 = vand.u32 %v679, 4294901760
        %1349 = vmatpush1.xpose.msra.mxu0 %v1348
        %1350 = vmatprep.subr.mxu0 0.0
        %v1351 = vand.u32 %v682, 4294901760
        %1352 = vmatpush1.xpose.msra.mxu0 %v1351
        %1353 = vmatprep.subr.mxu0 0.0
        %v1354 = vand.u32 %v685, 4294901760
        %1355 = vmatpush1.xpose.msra.mxu0 %v1354
        %1356 = vmatprep.subr.mxu0 0.0
        %v1357 = vand.u32 %v688, 4294901760
        %1358 = vmatpush1.xpose.msra.mxu0 %v1357
        %1359 = vmatprep.subr.mxu0 0.0
        %v1360 = vand.u32 %v691, 4294901760
        %1361 = vmatpush1.xpose.msra.mxu0 %v1360
        %1362 = vmatprep.subr.mxu0 0.0
        %v1363 = vand.u32 %v694, 4294901760
        %1364 = vmatpush1.xpose.msra.mxu0 %v1363
        %1365 = vmatprep.subr.mxu0 0.0
        %v1366 = vand.u32 %v697, 4294901760
        %1367 = vmatpush1.xpose.msra.mxu0 %v1366
        %1368 = vmatprep.mubr.f32.mxu0 0.0
        %v1369 = vand.u32 %v601, 4294901760
        %v1370 = vsub.f32 %v601, %v1369
        %v1371 = vand.u32 %v1370, 4294901760
        %1372 = vmatmul.mubr.f32.gmra.mrb[0].mxu0 %v1371
        %v1373 = vpop.f32.mrb[0].mxu0
        %v1374 = vadd.f32 %v1268, %v1373
        %v1375 = vpop.f32.mrb[0].mxu0
        %v1376 = vadd.f32 %v1270, %v1375
        %1377 = vdwg.mxu0
        %1378 = vmatprep.subr.mxu0 0.0
        %v1379 = vand.u32 %v604, 4294901760
        %v1380 = vsub.f32 %v604, %v1379
        %v1381 = vand.u32 %v1380, 4294901760
        %1382 = vmatpush1.xpose.msra.mxu0 %v1381
        %1383 = vmatprep.subr.mxu0 0.0
        %v1384 = vand.u32 %v607, 4294901760
        %v1385 = vsub.f32 %v607, %v1384
        %v1386 = vand.u32 %v1385, 4294901760
        %1387 = vmatpush1.xpose.msra.mxu0 %v1386
        %1388 = vmatprep.subr.mxu0 0.0
        %v1389 = vand.u32 %v610, 4294901760
        %v1390 = vsub.f32 %v610, %v1389
        %v1391 = vand.u32 %v1390, 4294901760
        %1392 = vmatpush1.xpose.msra.mxu0 %v1391
        %1393 = vmatprep.subr.mxu0 0.0
        %v1394 = vand.u32 %v613, 4294901760
        %v1395 = vsub.f32 %v613, %v1394
        %v1396 = vand.u32 %v1395, 4294901760
        %1397 = vmatpush1.xpose.msra.mxu0 %v1396
        %1398 = vmatprep.subr.mxu0 0.0
        %v1399 = vand.u32 %v616, 4294901760
        %v1400 = vsub.f32 %v616, %v1399
        %v1401 = vand.u32 %v1400, 4294901760
        %1402 = vmatpush1.xpose.msra.mxu0 %v1401
        %1403 = vmatprep.subr.mxu0 0.0
        %v1404 = vand.u32 %v619, 4294901760
        %v1405 = vsub.f32 %v619, %v1404
        %v1406 = vand.u32 %v1405, 4294901760
        %1407 = vmatpush1.xpose.msra.mxu0 %v1406
        %1408 = vmatprep.subr.mxu0 0.0
        %v1409 = vand.u32 %v622, 4294901760
        %v1410 = vsub.f32 %v622, %v1409
        %v1411 = vand.u32 %v1410, 4294901760
        %1412 = vmatpush1.xpose.msra.mxu0 %v1411
        %1413 = vmatprep.subr.mxu0 0.0
        %v1414 = vand.u32 %v625, 4294901760
        %v1415 = vsub.f32 %v625, %v1414
        %v1416 = vand.u32 %v1415, 4294901760
        %1417 = vmatpush1.xpose.msra.mxu0 %v1416
        %1418 = vmatprep.subr.mxu0 0.0
        %v1419 = vand.u32 %v628, 4294901760
        %v1420 = vsub.f32 %v628, %v1419
        %v1421 = vand.u32 %v1420, 4294901760
        %1422 = vmatpush1.xpose.msra.mxu0 %v1421
        %1423 = vmatprep.subr.mxu0 0.0
        %v1424 = vand.u32 %v631, 4294901760
        %v1425 = vsub.f32 %v631, %v1424
        %v1426 = vand.u32 %v1425, 4294901760
        %1427 = vmatpush1.xpose.msra.mxu0 %v1426
        %1428 = vmatprep.subr.mxu0 0.0
        %v1429 = vand.u32 %v634, 4294901760
        %v1430 = vsub.f32 %v634, %v1429
        %v1431 = vand.u32 %v1430, 4294901760
        %1432 = vmatpush1.xpose.msra.mxu0 %v1431
        %1433 = vmatprep.subr.mxu0 0.0
        %v1434 = vand.u32 %v637, 4294901760
        %v1435 = vsub.f32 %v637, %v1434
        %v1436 = vand.u32 %v1435, 4294901760
        %1437 = vmatpush1.xpose.msra.mxu0 %v1436
        %1438 = vmatprep.subr.mxu0 0.0
        %v1439 = vand.u32 %v640, 4294901760
        %v1440 = vsub.f32 %v640, %v1439
        %v1441 = vand.u32 %v1440, 4294901760
        %1442 = vmatpush1.xpose.msra.mxu0 %v1441
        %1443 = vmatprep.subr.mxu0 0.0
        %v1444 = vand.u32 %v643, 4294901760
        %v1445 = vsub.f32 %v643, %v1444
        %v1446 = vand.u32 %v1445, 4294901760
        %1447 = vmatpush1.xpose.msra.mxu0 %v1446
        %1448 = vmatprep.subr.mxu0 0.0
        %v1449 = vand.u32 %v646, 4294901760
        %v1450 = vsub.f32 %v646, %v1449
        %v1451 = vand.u32 %v1450, 4294901760
        %1452 = vmatpush1.xpose.msra.mxu0 %v1451
        %1453 = vmatprep.subr.mxu0 0.0
        %v1454 = vand.u32 %v649, 4294901760
        %v1455 = vsub.f32 %v649, %v1454
        %v1456 = vand.u32 %v1455, 4294901760
        %1457 = vmatpush1.xpose.msra.mxu0 %v1456
        %1458 = vmatprep.subr.mxu0 0.0
        %v1459 = vand.u32 %v652, 4294901760
        %v1460 = vsub.f32 %v652, %v1459
        %v1461 = vand.u32 %v1460, 4294901760
        %1462 = vmatpush1.xpose.msra.mxu0 %v1461
        %1463 = vmatprep.subr.mxu0 0.0
        %v1464 = vand.u32 %v655, 4294901760
        %v1465 = vsub.f32 %v655, %v1464
        %v1466 = vand.u32 %v1465, 4294901760
        %1467 = vmatpush1.xpose.msra.mxu0 %v1466
        %1468 = vmatprep.subr.mxu0 0.0
        %v1469 = vand.u32 %v658, 4294901760
        %v1470 = vsub.f32 %v658, %v1469
        %v1471 = vand.u32 %v1470, 4294901760
        %1472 = vmatpush1.xpose.msra.mxu0 %v1471
        %1473 = vmatprep.subr.mxu0 0.0
        %v1474 = vand.u32 %v661, 4294901760
        %v1475 = vsub.f32 %v661, %v1474
        %v1476 = vand.u32 %v1475, 4294901760
        %1477 = vmatpush1.xpose.msra.mxu0 %v1476
        %1478 = vmatprep.subr.mxu0 0.0
        %v1479 = vand.u32 %v664, 4294901760
        %v1480 = vsub.f32 %v664, %v1479
        %v1481 = vand.u32 %v1480, 4294901760
        %1482 = vmatpush1.xpose.msra.mxu0 %v1481
        %1483 = vmatprep.subr.mxu0 0.0
        %v1484 = vand.u32 %v667, 4294901760
        %v1485 = vsub.f32 %v667, %v1484
        %v1486 = vand.u32 %v1485, 4294901760
        %1487 = vmatpush1.xpose.msra.mxu0 %v1486
        %1488 = vmatprep.subr.mxu0 0.0
        %v1489 = vand.u32 %v670, 4294901760
        %v1490 = vsub.f32 %v670, %v1489
        %v1491 = vand.u32 %v1490, 4294901760
        %1492 = vmatpush1.xpose.msra.mxu0 %v1491
        %1493 = vmatprep.subr.mxu0 0.0
        %v1494 = vand.u32 %v673, 4294901760
        %v1495 = vsub.f32 %v673, %v1494
        %v1496 = vand.u32 %v1495, 4294901760
        %1497 = vmatpush1.xpose.msra.mxu0 %v1496
        %1498 = vmatprep.subr.mxu0 0.0
        %v1499 = vand.u32 %v676, 4294901760
        %v1500 = vsub.f32 %v676, %v1499
        %v1501 = vand.u32 %v1500, 4294901760
        %1502 = vmatpush1.xpose.msra.mxu0 %v1501
        %1503 = vmatprep.subr.mxu0 0.0
        %v1504 = vand.u32 %v679, 4294901760
        %v1505 = vsub.f32 %v679, %v1504
        %v1506 = vand.u32 %v1505, 4294901760
        %1507 = vmatpush1.xpose.msra.mxu0 %v1506
        %1508 = vmatprep.subr.mxu0 0.0
        %v1509 = vand.u32 %v682, 4294901760
        %v1510 = vsub.f32 %v682, %v1509
        %v1511 = vand.u32 %v1510, 4294901760
        %1512 = vmatpush1.xpose.msra.mxu0 %v1511
        %1513 = vmatprep.subr.mxu0 0.0
        %v1514 = vand.u32 %v685, 4294901760
        %v1515 = vsub.f32 %v685, %v1514
        %v1516 = vand.u32 %v1515, 4294901760
        %1517 = vmatpush1.xpose.msra.mxu0 %v1516
        %1518 = vmatprep.subr.mxu0 0.0
        %v1519 = vand.u32 %v688, 4294901760
        %v1520 = vsub.f32 %v688, %v1519
        %v1521 = vand.u32 %v1520, 4294901760
        %1522 = vmatpush1.xpose.msra.mxu0 %v1521
        %1523 = vmatprep.subr.mxu0 0.0
        %v1524 = vand.u32 %v691, 4294901760
        %v1525 = vsub.f32 %v691, %v1524
        %v1526 = vand.u32 %v1525, 4294901760
        %1527 = vmatpush1.xpose.msra.mxu0 %v1526
        %1528 = vmatprep.subr.mxu0 0.0
        %v1529 = vand.u32 %v694, 4294901760
        %v1530 = vsub.f32 %v694, %v1529
        %v1531 = vand.u32 %v1530, 4294901760
        %1532 = vmatpush1.xpose.msra.mxu0 %v1531
        %1533 = vmatprep.subr.mxu0 0.0
        %v1534 = vand.u32 %v697, 4294901760
        %v1535 = vsub.f32 %v697, %v1534
        %v1536 = vand.u32 %v1535, 4294901760
        %1537 = vmatpush1.xpose.msra.mxu0 %v1536
        %1538 = vmatprep.mubr.f32.mxu0 0.0
        %v1539 = vand.u32 %v601, 4294901760
        %1540 = vmatmul.mubr.f32.gmra.mrb[0].mxu0 %v1539
        %v1541 = vpop.f32.mrb[0].mxu0
        %v1542 = vadd.f32 %v1374, %v1541
        %v1543 = vpop.f32.mrb[0].mxu0
        %v1544 = vadd.f32 %v1376, %v1543
        %1545 = vdwg.mxu0
        %1546 = vmatprep.subr.mxu0 0.0
        %v1547 = vand.u32 %v604, 4294901760
        %1548 = vmatpush1.xpose.msra.mxu0 %v1547
        %1549 = vmatprep.subr.mxu0 0.0
        %v1550 = vand.u32 %v607, 4294901760
        %1551 = vmatpush1.xpose.msra.mxu0 %v1550
        %1552 = vmatprep.subr.mxu0 0.0
        %v1553 = vand.u32 %v610, 4294901760
        %1554 = vmatpush1.xpose.msra.mxu0 %v1553
        %1555 = vmatprep.subr.mxu0 0.0
        %v1556 = vand.u32 %v613, 4294901760
        %1557 = vmatpush1.xpose.msra.mxu0 %v1556
        %1558 = vmatprep.subr.mxu0 0.0
        %v1559 = vand.u32 %v616, 4294901760
        %1560 = vmatpush1.xpose.msra.mxu0 %v1559
        %1561 = vmatprep.subr.mxu0 0.0
        %v1562 = vand.u32 %v619, 4294901760
        %1563 = vmatpush1.xpose.msra.mxu0 %v1562
        %1564 = vmatprep.subr.mxu0 0.0
        %v1565 = vand.u32 %v622, 4294901760
        %1566 = vmatpush1.xpose.msra.mxu0 %v1565
        %1567 = vmatprep.subr.mxu0 0.0
        %v1568 = vand.u32 %v625, 4294901760
        %1569 = vmatpush1.xpose.msra.mxu0 %v1568
        %1570 = vmatprep.subr.mxu0 0.0
        %v1571 = vand.u32 %v628, 4294901760
        %1572 = vmatpush1.xpose.msra.mxu0 %v1571
        %1573 = vmatprep.subr.mxu0 0.0
        %v1574 = vand.u32 %v631, 4294901760
        %1575 = vmatpush1.xpose.msra.mxu0 %v1574
        %1576 = vmatprep.subr.mxu0 0.0
        %v1577 = vand.u32 %v634, 4294901760
        %1578 = vmatpush1.xpose.msra.mxu0 %v1577
        %1579 = vmatprep.subr.mxu0 0.0
        %v1580 = vand.u32 %v637, 4294901760
        %1581 = vmatpush1.xpose.msra.mxu0 %v1580
        %1582 = vmatprep.subr.mxu0 0.0
        %v1583 = vand.u32 %v640, 4294901760
        %1584 = vmatpush1.xpose.msra.mxu0 %v1583
        %1585 = vmatprep.subr.mxu0 0.0
        %v1586 = vand.u32 %v643, 4294901760
        %1587 = vmatpush1.xpose.msra.mxu0 %v1586
        %1588 = vmatprep.subr.mxu0 0.0
        %v1589 = vand.u32 %v646, 4294901760
        %1590 = vmatpush1.xpose.msra.mxu0 %v1589
        %1591 = vmatprep.subr.mxu0 0.0
        %v1592 = vand.u32 %v649, 4294901760
        %1593 = vmatpush1.xpose.msra.mxu0 %v1592
        %1594 = vmatprep.subr.mxu0 0.0
        %v1595 = vand.u32 %v652, 4294901760
        %1596 = vmatpush1.xpose.msra.mxu0 %v1595
        %1597 = vmatprep.subr.mxu0 0.0
        %v1598 = vand.u32 %v655, 4294901760
        %1599 = vmatpush1.xpose.msra.mxu0 %v1598
        %1600 = vmatprep.subr.mxu0 0.0
        %v1601 = vand.u32 %v658, 4294901760
        %1602 = vmatpush1.xpose.msra.mxu0 %v1601
        %1603 = vmatprep.subr.mxu0 0.0
        %v1604 = vand.u32 %v661, 4294901760
        %1605 = vmatpush1.xpose.msra.mxu0 %v1604
        %1606 = vmatprep.subr.mxu0 0.0
        %v1607 = vand.u32 %v664, 4294901760
        %1608 = vmatpush1.xpose.msra.mxu0 %v1607
        %1609 = vmatprep.subr.mxu0 0.0
        %v1610 = vand.u32 %v667, 4294901760
        %1611 = vmatpush1.xpose.msra.mxu0 %v1610
        %1612 = vmatprep.subr.mxu0 0.0
        %v1613 = vand.u32 %v670, 4294901760
        %1614 = vmatpush1.xpose.msra.mxu0 %v1613
        %1615 = vmatprep.subr.mxu0 0.0
        %v1616 = vand.u32 %v673, 4294901760
        %1617 = vmatpush1.xpose.msra.mxu0 %v1616
        %1618 = vmatprep.subr.mxu0 0.0
        %v1619 = vand.u32 %v676, 4294901760
        %1620 = vmatpush1.xpose.msra.mxu0 %v1619
        %1621 = vmatprep.subr.mxu0 0.0
        %v1622 = vand.u32 %v679, 4294901760
        %1623 = vmatpush1.xpose.msra.mxu0 %v1622
        %1624 = vmatprep.subr.mxu0 0.0
        %v1625 = vand.u32 %v682, 4294901760
        %1626 = vmatpush1.xpose.msra.mxu0 %v1625
        %1627 = vmatprep.subr.mxu0 0.0
        %v1628 = vand.u32 %v685, 4294901760
        %1629 = vmatpush1.xpose.msra.mxu0 %v1628
        %1630 = vmatprep.subr.mxu0 0.0
        %v1631 = vand.u32 %v688, 4294901760
        %1632 = vmatpush1.xpose.msra.mxu0 %v1631
        %1633 = vmatprep.subr.mxu0 0.0
        %v1634 = vand.u32 %v691, 4294901760
        %1635 = vmatpush1.xpose.msra.mxu0 %v1634
        %1636 = vmatprep.subr.mxu0 0.0
        %v1637 = vand.u32 %v694, 4294901760
        %1638 = vmatpush1.xpose.msra.mxu0 %v1637
        %1639 = vmatprep.subr.mxu0 0.0
        %v1640 = vand.u32 %v697, 4294901760
        %1641 = vmatpush1.xpose.msra.mxu0 %v1640
        %1642 = vmatprep.mubr.f32.mxu0 0.0
        %v1643 = vand.u32 %v601, 4294901760
        %1644 = vmatmul.mubr.f32.gmra.mrb[0].mxu0 %v1643
        %v1645 = vpop.f32.mrb[0].mxu0
        %v1646 = vadd.f32 %v1542, %v1645
        %v1647 = vpop.f32.mrb[0].mxu0
        %v1648 = vadd.f32 %v1544, %v1647
        %1649 = vdwg.mxu0
        %1650 = vmatprep.subr.mxu0 0.0
        %v1651 = vand.u32 %v700, 4294901760
        %1652 = vmatpush1.xpose.msra.mxu0 %v1651
        %1653 = vmatprep.subr.mxu0 0.0
        %v1654 = vand.u32 %v703, 4294901760
        %1655 = vmatpush1.xpose.msra.mxu0 %v1654
        %1656 = vmatprep.subr.mxu0 0.0
        %v1657 = vand.u32 %v706, 4294901760
        %1658 = vmatpush1.xpose.msra.mxu0 %v1657
        %1659 = vmatprep.subr.mxu0 0.0
        %v1660 = vand.u32 %v709, 4294901760
        %1661 = vmatpush1.xpose.msra.mxu0 %v1660
        %1662 = vmatprep.subr.mxu0 0.0
        %v1663 = vand.u32 %v712, 4294901760
        %1664 = vmatpush1.xpose.msra.mxu0 %v1663
        %1665 = vmatprep.subr.mxu0 0.0
        %v1666 = vand.u32 %v715, 4294901760
        %1667 = vmatpush1.xpose.msra.mxu0 %v1666
        %1668 = vmatprep.subr.mxu0 0.0
        %v1669 = vand.u32 %v718, 4294901760
        %1670 = vmatpush1.xpose.msra.mxu0 %v1669
        %1671 = vmatprep.subr.mxu0 0.0
        %v1672 = vand.u32 %v721, 4294901760
        %1673 = vmatpush1.xpose.msra.mxu0 %v1672
        %1674 = vmatprep.subr.mxu0 0.0
        %v1675 = vand.u32 %v724, 4294901760
        %1676 = vmatpush1.xpose.msra.mxu0 %v1675
        %1677 = vmatprep.subr.mxu0 0.0
        %v1678 = vand.u32 %v727, 4294901760
        %1679 = vmatpush1.xpose.msra.mxu0 %v1678
        %1680 = vmatprep.subr.mxu0 0.0
        %v1681 = vand.u32 %v730, 4294901760
        %1682 = vmatpush1.xpose.msra.mxu0 %v1681
        %1683 = vmatprep.subr.mxu0 0.0
        %v1684 = vand.u32 %v733, 4294901760
        %1685 = vmatpush1.xpose.msra.mxu0 %v1684
        %1686 = vmatprep.subr.mxu0 0.0
        %v1687 = vand.u32 %v736, 4294901760
        %1688 = vmatpush1.xpose.msra.mxu0 %v1687
        %1689 = vmatprep.subr.mxu0 0.0
        %v1690 = vand.u32 %v739, 4294901760
        %1691 = vmatpush1.xpose.msra.mxu0 %v1690
        %1692 = vmatprep.subr.mxu0 0.0
        %v1693 = vand.u32 %v742, 4294901760
        %1694 = vmatpush1.xpose.msra.mxu0 %v1693
        %1695 = vmatprep.subr.mxu0 0.0
        %v1696 = vand.u32 %v745, 4294901760
        %1697 = vmatpush1.xpose.msra.mxu0 %v1696
        %1698 = vmatprep.subr.mxu0 0.0
        %v1699 = vand.u32 %v748, 4294901760
        %1700 = vmatpush1.xpose.msra.mxu0 %v1699
        %1701 = vmatprep.subr.mxu0 0.0
        %v1702 = vand.u32 %v751, 4294901760
        %1703 = vmatpush1.xpose.msra.mxu0 %v1702
        %1704 = vmatprep.subr.mxu0 0.0
        %v1705 = vand.u32 %v754, 4294901760
        %1706 = vmatpush1.xpose.msra.mxu0 %v1705
        %1707 = vmatprep.subr.mxu0 0.0
        %v1708 = vand.u32 %v757, 4294901760
        %1709 = vmatpush1.xpose.msra.mxu0 %v1708
        %1710 = vmatprep.subr.mxu0 0.0
        %v1711 = vand.u32 %v760, 4294901760
        %1712 = vmatpush1.xpose.msra.mxu0 %v1711
        %1713 = vmatprep.subr.mxu0 0.0
        %v1714 = vand.u32 %v763, 4294901760
        %1715 = vmatpush1.xpose.msra.mxu0 %v1714
        %1716 = vmatprep.subr.mxu0 0.0
        %v1717 = vand.u32 %v766, 4294901760
        %1718 = vmatpush1.xpose.msra.mxu0 %v1717
        %1719 = vmatprep.subr.mxu0 0.0
        %v1720 = vand.u32 %v769, 4294901760
        %1721 = vmatpush1.xpose.msra.mxu0 %v1720
        %1722 = vmatprep.subr.mxu0 0.0
        %v1723 = vand.u32 %v772, 4294901760
        %1724 = vmatpush1.xpose.msra.mxu0 %v1723
        %1725 = vmatprep.subr.mxu0 0.0
        %v1726 = vand.u32 %v775, 4294901760
        %1727 = vmatpush1.xpose.msra.mxu0 %v1726
        %1728 = vmatprep.subr.mxu0 0.0
        %v1729 = vand.u32 %v778, 4294901760
        %1730 = vmatpush1.xpose.msra.mxu0 %v1729
        %1731 = vmatprep.subr.mxu0 0.0
        %v1732 = vand.u32 %v781, 4294901760
        %1733 = vmatpush1.xpose.msra.mxu0 %v1732
        %1734 = vmatprep.subr.mxu0 0.0
        %v1735 = vand.u32 %v784, 4294901760
        %1736 = vmatpush1.xpose.msra.mxu0 %v1735
        %1737 = vmatprep.subr.mxu0 0.0
        %v1738 = vand.u32 %v787, 4294901760
        %1739 = vmatpush1.xpose.msra.mxu0 %v1738
        %1740 = vmatprep.subr.mxu0 0.0
        %v1741 = vand.u32 %v790, 4294901760
        %1742 = vmatpush1.xpose.msra.mxu0 %v1741
        %1743 = vmatprep.subr.mxu0 0.0
        %v1744 = vand.u32 %v793, 4294901760
        %1745 = vmatpush1.xpose.msra.mxu0 %v1744
        %1746 = vmatprep.mubr.f32.mxu0 0.0
        %v1747 = vand.u32 %v601, 4294901760
        %v1748 = vsub.f32 %v601, %v1747
        %v1749 = vand.u32 %v1748, 4294901760
        %v1750 = vsub.f32 %v1748, %v1749
        %v1751 = vand.u32 %v1750, 4294901760
        %1752 = vmatmul.mubr.f32.gmra.mrb[0].mxu0 %v1751
        %v1753 = vpop.f32.mrb[0].mxu0
        %v1754 = vadd.f32 0.0, %v1753
        %v1755 = vpop.f32.mrb[0].mxu0
        %v1756 = vadd.f32 0.0, %v1755
        %1757 = vdwg.mxu0
        %1758 = vmatprep.subr.mxu0 0.0
        %v1759 = vand.u32 %v700, 4294901760
        %v1760 = vsub.f32 %v700, %v1759
        %v1761 = vand.u32 %v1760, 4294901760
        %v1762 = vsub.f32 %v1760, %v1761
        %v1763 = vand.u32 %v1762, 4294901760
        %1764 = vmatpush1.xpose.msra.mxu0 %v1763
        %1765 = vmatprep.subr.mxu0 0.0
        %v1766 = vand.u32 %v703, 4294901760
        %v1767 = vsub.f32 %v703, %v1766
        %v1768 = vand.u32 %v1767, 4294901760
        %v1769 = vsub.f32 %v1767, %v1768
        %v1770 = vand.u32 %v1769, 4294901760
        %1771 = vmatpush1.xpose.msra.mxu0 %v1770
        %1772 = vmatprep.subr.mxu0 0.0
        %v1773 = vand.u32 %v706, 4294901760
        %v1774 = vsub.f32 %v706, %v1773
        %v1775 = vand.u32 %v1774, 4294901760
        %v1776 = vsub.f32 %v1774, %v1775
        %v1777 = vand.u32 %v1776, 4294901760
        %1778 = vmatpush1.xpose.msra.mxu0 %v1777
        %1779 = vmatprep.subr.mxu0 0.0
        %v1780 = vand.u32 %v709, 4294901760
        %v1781 = vsub.f32 %v709, %v1780
        %v1782 = vand.u32 %v1781, 4294901760
        %v1783 = vsub.f32 %v1781, %v1782
        %v1784 = vand.u32 %v1783, 4294901760
        %1785 = vmatpush1.xpose.msra.mxu0 %v1784
        %1786 = vmatprep.subr.mxu0 0.0
        %v1787 = vand.u32 %v712, 4294901760
        %v1788 = vsub.f32 %v712, %v1787
        %v1789 = vand.u32 %v1788, 4294901760
        %v1790 = vsub.f32 %v1788, %v1789
        %v1791 = vand.u32 %v1790, 4294901760
        %1792 = vmatpush1.xpose.msra.mxu0 %v1791
        %1793 = vmatprep.subr.mxu0 0.0
        %v1794 = vand.u32 %v715, 4294901760
        %v1795 = vsub.f32 %v715, %v1794
        %v1796 = vand.u32 %v1795, 4294901760
        %v1797 = vsub.f32 %v1795, %v1796
        %v1798 = vand.u32 %v1797, 4294901760
        %1799 = vmatpush1.xpose.msra.mxu0 %v1798
        %1800 = vmatprep.subr.mxu0 0.0
        %v1801 = vand.u32 %v718, 4294901760
        %v1802 = vsub.f32 %v718, %v1801
        %v1803 = vand.u32 %v1802, 4294901760
        %v1804 = vsub.f32 %v1802, %v1803
        %v1805 = vand.u32 %v1804, 4294901760
        %1806 = vmatpush1.xpose.msra.mxu0 %v1805
        %1807 = vmatprep.subr.mxu0 0.0
        %v1808 = vand.u32 %v721, 4294901760
        %v1809 = vsub.f32 %v721, %v1808
        %v1810 = vand.u32 %v1809, 4294901760
        %v1811 = vsub.f32 %v1809, %v1810
        %v1812 = vand.u32 %v1811, 4294901760
        %1813 = vmatpush1.xpose.msra.mxu0 %v1812
        %1814 = vmatprep.subr.mxu0 0.0
        %v1815 = vand.u32 %v724, 4294901760
        %v1816 = vsub.f32 %v724, %v1815
        %v1817 = vand.u32 %v1816, 4294901760
        %v1818 = vsub.f32 %v1816, %v1817
        %v1819 = vand.u32 %v1818, 4294901760
        %1820 = vmatpush1.xpose.msra.mxu0 %v1819
        %1821 = vmatprep.subr.mxu0 0.0
        %v1822 = vand.u32 %v727, 4294901760
        %v1823 = vsub.f32 %v727, %v1822
        %v1824 = vand.u32 %v1823, 4294901760
        %v1825 = vsub.f32 %v1823, %v1824
        %v1826 = vand.u32 %v1825, 4294901760
        %1827 = vmatpush1.xpose.msra.mxu0 %v1826
        %1828 = vmatprep.subr.mxu0 0.0
        %v1829 = vand.u32 %v730, 4294901760
        %v1830 = vsub.f32 %v730, %v1829
        %v1831 = vand.u32 %v1830, 4294901760
        %v1832 = vsub.f32 %v1830, %v1831
        %v1833 = vand.u32 %v1832, 4294901760
        %1834 = vmatpush1.xpose.msra.mxu0 %v1833
        %1835 = vmatprep.subr.mxu0 0.0
        %v1836 = vand.u32 %v733, 4294901760
        %v1837 = vsub.f32 %v733, %v1836
        %v1838 = vand.u32 %v1837, 4294901760
        %v1839 = vsub.f32 %v1837, %v1838
        %v1840 = vand.u32 %v1839, 4294901760
        %1841 = vmatpush1.xpose.msra.mxu0 %v1840
        %1842 = vmatprep.subr.mxu0 0.0
        %v1843 = vand.u32 %v736, 4294901760
        %v1844 = vsub.f32 %v736, %v1843
        %v1845 = vand.u32 %v1844, 4294901760
        %v1846 = vsub.f32 %v1844, %v1845
        %v1847 = vand.u32 %v1846, 4294901760
        %1848 = vmatpush1.xpose.msra.mxu0 %v1847
        %1849 = vmatprep.subr.mxu0 0.0
        %v1850 = vand.u32 %v739, 4294901760
        %v1851 = vsub.f32 %v739, %v1850
        %v1852 = vand.u32 %v1851, 4294901760
        %v1853 = vsub.f32 %v1851, %v1852
        %v1854 = vand.u32 %v1853, 4294901760
        %1855 = vmatpush1.xpose.msra.mxu0 %v1854
        %1856 = vmatprep.subr.mxu0 0.0
        %v1857 = vand.u32 %v742, 4294901760
        %v1858 = vsub.f32 %v742, %v1857
        %v1859 = vand.u32 %v1858, 4294901760
        %v1860 = vsub.f32 %v1858, %v1859
        %v1861 = vand.u32 %v1860, 4294901760
        %1862 = vmatpush1.xpose.msra.mxu0 %v1861
        %1863 = vmatprep.subr.mxu0 0.0
        %v1864 = vand.u32 %v745, 4294901760
        %v1865 = vsub.f32 %v745, %v1864
        %v1866 = vand.u32 %v1865, 4294901760
        %v1867 = vsub.f32 %v1865, %v1866
        %v1868 = vand.u32 %v1867, 4294901760
        %1869 = vmatpush1.xpose.msra.mxu0 %v1868
        %1870 = vmatprep.subr.mxu0 0.0
        %v1871 = vand.u32 %v748, 4294901760
        %v1872 = vsub.f32 %v748, %v1871
        %v1873 = vand.u32 %v1872, 4294901760
        %v1874 = vsub.f32 %v1872, %v1873
        %v1875 = vand.u32 %v1874, 4294901760
        %1876 = vmatpush1.xpose.msra.mxu0 %v1875
        %1877 = vmatprep.subr.mxu0 0.0
        %v1878 = vand.u32 %v751, 4294901760
        %v1879 = vsub.f32 %v751, %v1878
        %v1880 = vand.u32 %v1879, 4294901760
        %v1881 = vsub.f32 %v1879, %v1880
        %v1882 = vand.u32 %v1881, 4294901760
        %1883 = vmatpush1.xpose.msra.mxu0 %v1882
        %1884 = vmatprep.subr.mxu0 0.0
        %v1885 = vand.u32 %v754, 4294901760
        %v1886 = vsub.f32 %v754, %v1885
        %v1887 = vand.u32 %v1886, 4294901760
        %v1888 = vsub.f32 %v1886, %v1887
        %v1889 = vand.u32 %v1888, 4294901760
        %1890 = vmatpush1.xpose.msra.mxu0 %v1889
        %1891 = vmatprep.subr.mxu0 0.0
        %v1892 = vand.u32 %v757, 4294901760
        %v1893 = vsub.f32 %v757, %v1892
        %v1894 = vand.u32 %v1893, 4294901760
        %v1895 = vsub.f32 %v1893, %v1894
        %v1896 = vand.u32 %v1895, 4294901760
        %1897 = vmatpush1.xpose.msra.mxu0 %v1896
        %1898 = vmatprep.subr.mxu0 0.0
        %v1899 = vand.u32 %v760, 4294901760
        %v1900 = vsub.f32 %v760, %v1899
        %v1901 = vand.u32 %v1900, 4294901760
        %v1902 = vsub.f32 %v1900, %v1901
        %v1903 = vand.u32 %v1902, 4294901760
        %1904 = vmatpush1.xpose.msra.mxu0 %v1903
        %1905 = vmatprep.subr.mxu0 0.0
        %v1906 = vand.u32 %v763, 4294901760
        %v1907 = vsub.f32 %v763, %v1906
        %v1908 = vand.u32 %v1907, 4294901760
        %v1909 = vsub.f32 %v1907, %v1908
        %v1910 = vand.u32 %v1909, 4294901760
        %1911 = vmatpush1.xpose.msra.mxu0 %v1910
        %1912 = vmatprep.subr.mxu0 0.0
        %v1913 = vand.u32 %v766, 4294901760
        %v1914 = vsub.f32 %v766, %v1913
        %v1915 = vand.u32 %v1914, 4294901760
        %v1916 = vsub.f32 %v1914, %v1915
        %v1917 = vand.u32 %v1916, 4294901760
        %1918 = vmatpush1.xpose.msra.mxu0 %v1917
        %1919 = vmatprep.subr.mxu0 0.0
        %v1920 = vand.u32 %v769, 4294901760
        %v1921 = vsub.f32 %v769, %v1920
        %v1922 = vand.u32 %v1921, 4294901760
        %v1923 = vsub.f32 %v1921, %v1922
        %v1924 = vand.u32 %v1923, 4294901760
        %1925 = vmatpush1.xpose.msra.mxu0 %v1924
        %1926 = vmatprep.subr.mxu0 0.0
        %v1927 = vand.u32 %v772, 4294901760
        %v1928 = vsub.f32 %v772, %v1927
        %v1929 = vand.u32 %v1928, 4294901760
        %v1930 = vsub.f32 %v1928, %v1929
        %v1931 = vand.u32 %v1930, 4294901760
        %1932 = vmatpush1.xpose.msra.mxu0 %v1931
        %1933 = vmatprep.subr.mxu0 0.0
        %v1934 = vand.u32 %v775, 4294901760
        %v1935 = vsub.f32 %v775, %v1934
        %v1936 = vand.u32 %v1935, 4294901760
        %v1937 = vsub.f32 %v1935, %v1936
        %v1938 = vand.u32 %v1937, 4294901760
        %1939 = vmatpush1.xpose.msra.mxu0 %v1938
        %1940 = vmatprep.subr.mxu0 0.0
        %v1941 = vand.u32 %v778, 4294901760
        %v1942 = vsub.f32 %v778, %v1941
        %v1943 = vand.u32 %v1942, 4294901760
        %v1944 = vsub.f32 %v1942, %v1943
        %v1945 = vand.u32 %v1944, 4294901760
        %1946 = vmatpush1.xpose.msra.mxu0 %v1945
        %1947 = vmatprep.subr.mxu0 0.0
        %v1948 = vand.u32 %v781, 4294901760
        %v1949 = vsub.f32 %v781, %v1948
        %v1950 = vand.u32 %v1949, 4294901760
        %v1951 = vsub.f32 %v1949, %v1950
        %v1952 = vand.u32 %v1951, 4294901760
        %1953 = vmatpush1.xpose.msra.mxu0 %v1952
        %1954 = vmatprep.subr.mxu0 0.0
        %v1955 = vand.u32 %v784, 4294901760
        %v1956 = vsub.f32 %v784, %v1955
        %v1957 = vand.u32 %v1956, 4294901760
        %v1958 = vsub.f32 %v1956, %v1957
        %v1959 = vand.u32 %v1958, 4294901760
        %1960 = vmatpush1.xpose.msra.mxu0 %v1959
        %1961 = vmatprep.subr.mxu0 0.0
        %v1962 = vand.u32 %v787, 4294901760
        %v1963 = vsub.f32 %v787, %v1962
        %v1964 = vand.u32 %v1963, 4294901760
        %v1965 = vsub.f32 %v1963, %v1964
        %v1966 = vand.u32 %v1965, 4294901760
        %1967 = vmatpush1.xpose.msra.mxu0 %v1966
        %1968 = vmatprep.subr.mxu0 0.0
        %v1969 = vand.u32 %v790, 4294901760
        %v1970 = vsub.f32 %v790, %v1969
        %v1971 = vand.u32 %v1970, 4294901760
        %v1972 = vsub.f32 %v1970, %v1971
        %v1973 = vand.u32 %v1972, 4294901760
        %1974 = vmatpush1.xpose.msra.mxu0 %v1973
        %1975 = vmatprep.subr.mxu0 0.0
        %v1976 = vand.u32 %v793, 4294901760
        %v1977 = vsub.f32 %v793, %v1976
        %v1978 = vand.u32 %v1977, 4294901760
        %v1979 = vsub.f32 %v1977, %v1978
        %v1980 = vand.u32 %v1979, 4294901760
        %1981 = vmatpush1.xpose.msra.mxu0 %v1980
        %1982 = vmatprep.mubr.f32.mxu0 0.0
        %v1983 = vand.u32 %v601, 4294901760
        %1984 = vmatmul.mubr.f32.gmra.mrb[0].mxu0 %v1983
        %v1985 = vpop.f32.mrb[0].mxu0
        %v1986 = vadd.f32 %v1754, %v1985
        %v1987 = vpop.f32.mrb[0].mxu0
        %v1988 = vadd.f32 %v1756, %v1987
        %1989 = vdwg.mxu0
        %1990 = vmatprep.subr.mxu0 0.0
        %v1991 = vand.u32 %v700, 4294901760
        %v1992 = vsub.f32 %v700, %v1991
        %1993 = vmatpush1.xpose.msra.mxu0 %v1992
        %1994 = vmatprep.subr.mxu0 0.0
        %v1995 = vand.u32 %v703, 4294901760
        %v1996 = vsub.f32 %v703, %v1995
        %1997 = vmatpush1.xpose.msra.mxu0 %v1996
        %1998 = vmatprep.subr.mxu0 0.0
        %v1999 = vand.u32 %v706, 4294901760
        %v2000 = vsub.f32 %v706, %v1999
        %2001 = vmatpush1.xpose.msra.mxu0 %v2000
        %2002 = vmatprep.subr.mxu0 0.0
        %v2003 = vand.u32 %v709, 4294901760
        %v2004 = vsub.f32 %v709, %v2003
        %2005 = vmatpush1.xpose.msra.mxu0 %v2004
        %2006 = vmatprep.subr.mxu0 0.0
        %v2007 = vand.u32 %v712, 4294901760
        %v2008 = vsub.f32 %v712, %v2007
        %2009 = vmatpush1.xpose.msra.mxu0 %v2008
        %2010 = vmatprep.subr.mxu0 0.0
        %v2011 = vand.u32 %v715, 4294901760
        %v2012 = vsub.f32 %v715, %v2011
        %2013 = vmatpush1.xpose.msra.mxu0 %v2012
        %2014 = vmatprep.subr.mxu0 0.0
        %v2015 = vand.u32 %v718, 4294901760
        %v2016 = vsub.f32 %v718, %v2015
        %2017 = vmatpush1.xpose.msra.mxu0 %v2016
        %2018 = vmatprep.subr.mxu0 0.0
        %v2019 = vand.u32 %v721, 4294901760
        %v2020 = vsub.f32 %v721, %v2019
        %2021 = vmatpush1.xpose.msra.mxu0 %v2020
        %2022 = vmatprep.subr.mxu0 0.0
        %v2023 = vand.u32 %v724, 4294901760
        %v2024 = vsub.f32 %v724, %v2023
        %2025 = vmatpush1.xpose.msra.mxu0 %v2024
        %2026 = vmatprep.subr.mxu0 0.0
        %v2027 = vand.u32 %v727, 4294901760
        %v2028 = vsub.f32 %v727, %v2027
        %2029 = vmatpush1.xpose.msra.mxu0 %v2028
        %2030 = vmatprep.subr.mxu0 0.0
        %v2031 = vand.u32 %v730, 4294901760
        %v2032 = vsub.f32 %v730, %v2031
        %2033 = vmatpush1.xpose.msra.mxu0 %v2032
        %2034 = vmatprep.subr.mxu0 0.0
        %v2035 = vand.u32 %v733, 4294901760
        %v2036 = vsub.f32 %v733, %v2035
        %2037 = vmatpush1.xpose.msra.mxu0 %v2036
        %2038 = vmatprep.subr.mxu0 0.0
        %v2039 = vand.u32 %v736, 4294901760
        %v2040 = vsub.f32 %v736, %v2039
        %2041 = vmatpush1.xpose.msra.mxu0 %v2040
        %2042 = vmatprep.subr.mxu0 0.0
        %v2043 = vand.u32 %v739, 4294901760
        %v2044 = vsub.f32 %v739, %v2043
        %2045 = vmatpush1.xpose.msra.mxu0 %v2044
        %2046 = vmatprep.subr.mxu0 0.0
        %v2047 = vand.u32 %v742, 4294901760
        %v2048 = vsub.f32 %v742, %v2047
        %2049 = vmatpush1.xpose.msra.mxu0 %v2048
        %2050 = vmatprep.subr.mxu0 0.0
        %v2051 = vand.u32 %v745, 4294901760
        %v2052 = vsub.f32 %v745, %v2051
        %2053 = vmatpush1.xpose.msra.mxu0 %v2052
        %2054 = vmatprep.subr.mxu0 0.0
        %v2055 = vand.u32 %v748, 4294901760
        %v2056 = vsub.f32 %v748, %v2055
        %2057 = vmatpush1.xpose.msra.mxu0 %v2056
        %2058 = vmatprep.subr.mxu0 0.0
        %v2059 = vand.u32 %v751, 4294901760
        %v2060 = vsub.f32 %v751, %v2059
        %2061 = vmatpush1.xpose.msra.mxu0 %v2060
        %2062 = vmatprep.subr.mxu0 0.0
        %v2063 = vand.u32 %v754, 4294901760
        %v2064 = vsub.f32 %v754, %v2063
        %2065 = vmatpush1.xpose.msra.mxu0 %v2064
        %2066 = vmatprep.subr.mxu0 0.0
        %v2067 = vand.u32 %v757, 4294901760
        %v2068 = vsub.f32 %v757, %v2067
        %2069 = vmatpush1.xpose.msra.mxu0 %v2068
        %2070 = vmatprep.subr.mxu0 0.0
        %v2071 = vand.u32 %v760, 4294901760
        %v2072 = vsub.f32 %v760, %v2071
        %2073 = vmatpush1.xpose.msra.mxu0 %v2072
        %2074 = vmatprep.subr.mxu0 0.0
        %v2075 = vand.u32 %v763, 4294901760
        %v2076 = vsub.f32 %v763, %v2075
        %2077 = vmatpush1.xpose.msra.mxu0 %v2076
        %2078 = vmatprep.subr.mxu0 0.0
        %v2079 = vand.u32 %v766, 4294901760
        %v2080 = vsub.f32 %v766, %v2079
        %2081 = vmatpush1.xpose.msra.mxu0 %v2080
        %2082 = vmatprep.subr.mxu0 0.0
        %v2083 = vand.u32 %v769, 4294901760
        %v2084 = vsub.f32 %v769, %v2083
        %2085 = vmatpush1.xpose.msra.mxu0 %v2084
        %2086 = vmatprep.subr.mxu0 0.0
        %v2087 = vand.u32 %v772, 4294901760
        %v2088 = vsub.f32 %v772, %v2087
        %2089 = vmatpush1.xpose.msra.mxu0 %v2088
        %2090 = vmatprep.subr.mxu0 0.0
        %v2091 = vand.u32 %v775, 4294901760
        %v2092 = vsub.f32 %v775, %v2091
        %2093 = vmatpush1.xpose.msra.mxu0 %v2092
        %2094 = vmatprep.subr.mxu0 0.0
        %v2095 = vand.u32 %v778, 4294901760
        %v2096 = vsub.f32 %v778, %v2095
        %2097 = vmatpush1.xpose.msra.mxu0 %v2096
        %2098 = vmatprep.subr.mxu0 0.0
        %v2099 = vand.u32 %v781, 4294901760
        %v2100 = vsub.f32 %v781, %v2099
        %2101 = vmatpush1.xpose.msra.mxu0 %v2100
        %2102 = vmatprep.subr.mxu0 0.0
        %v2103 = vand.u32 %v784, 4294901760
        %v2104 = vsub.f32 %v784, %v2103
        %2105 = vmatpush1.xpose.msra.mxu0 %v2104
        %2106 = vmatprep.subr.mxu0 0.0
        %v2107 = vand.u32 %v787, 4294901760
        %v2108 = vsub.f32 %v787, %v2107
        %2109 = vmatpush1.xpose.msra.mxu0 %v2108
        %2110 = vmatprep.subr.mxu0 0.0
        %v2111 = vand.u32 %v790, 4294901760
        %v2112 = vsub.f32 %v790, %v2111
        %2113 = vmatpush1.xpose.msra.mxu0 %v2112
        %2114 = vmatprep.subr.mxu0 0.0
        %v2115 = vand.u32 %v793, 4294901760
        %v2116 = vsub.f32 %v793, %v2115
        %2117 = vmatpush1.xpose.msra.mxu0 %v2116
        %2118 = vmatprep.mubr.f32.mxu0 0.0
        %v2119 = vand.u32 %v601, 4294901760
        %v2120 = vsub.f32 %v601, %v2119
        %2121 = vmatmul.mubr.f32.gmra.mrb[0].mxu0 %v2120
        %v2122 = vpop.f32.mrb[0].mxu0
        %v2123 = vadd.f32 %v1986, %v2122
        %v2124 = vpop.f32.mrb[0].mxu0
        %v2125 = vadd.f32 %v1988, %v2124
        %2126 = vdwg.mxu0
        %2127 = vmatprep.subr.mxu0 0.0
        %v2128 = vand.u32 %v700, 4294901760
        %2129 = vmatpush1.xpose.msra.mxu0 %v2128
        %2130 = vmatprep.subr.mxu0 0.0
        %v2131 = vand.u32 %v703, 4294901760
        %2132 = vmatpush1.xpose.msra.mxu0 %v2131
        %2133 = vmatprep.subr.mxu0 0.0
        %v2134 = vand.u32 %v706, 4294901760
        %2135 = vmatpush1.xpose.msra.mxu0 %v2134
        %2136 = vmatprep.subr.mxu0 0.0
        %v2137 = vand.u32 %v709, 4294901760
        %2138 = vmatpush1.xpose.msra.mxu0 %v2137
        %2139 = vmatprep.subr.mxu0 0.0
        %v2140 = vand.u32 %v712, 4294901760
        %2141 = vmatpush1.xpose.msra.mxu0 %v2140
        %2142 = vmatprep.subr.mxu0 0.0
        %v2143 = vand.u32 %v715, 4294901760
        %2144 = vmatpush1.xpose.msra.mxu0 %v2143
        %2145 = vmatprep.subr.mxu0 0.0
        %v2146 = vand.u32 %v718, 4294901760
        %2147 = vmatpush1.xpose.msra.mxu0 %v2146
        %2148 = vmatprep.subr.mxu0 0.0
        %v2149 = vand.u32 %v721, 4294901760
        %2150 = vmatpush1.xpose.msra.mxu0 %v2149
        %2151 = vmatprep.subr.mxu0 0.0
        %v2152 = vand.u32 %v724, 4294901760
        %2153 = vmatpush1.xpose.msra.mxu0 %v2152
        %2154 = vmatprep.subr.mxu0 0.0
        %v2155 = vand.u32 %v727, 4294901760
        %2156 = vmatpush1.xpose.msra.mxu0 %v2155
        %2157 = vmatprep.subr.mxu0 0.0
        %v2158 = vand.u32 %v730, 4294901760
        %2159 = vmatpush1.xpose.msra.mxu0 %v2158
        %2160 = vmatprep.subr.mxu0 0.0
        %v2161 = vand.u32 %v733, 4294901760
        %2162 = vmatpush1.xpose.msra.mxu0 %v2161
        %2163 = vmatprep.subr.mxu0 0.0
        %v2164 = vand.u32 %v736, 4294901760
        %2165 = vmatpush1.xpose.msra.mxu0 %v2164
        %2166 = vmatprep.subr.mxu0 0.0
        %v2167 = vand.u32 %v739, 4294901760
        %2168 = vmatpush1.xpose.msra.mxu0 %v2167
        %2169 = vmatprep.subr.mxu0 0.0
        %v2170 = vand.u32 %v742, 4294901760
        %2171 = vmatpush1.xpose.msra.mxu0 %v2170
        %2172 = vmatprep.subr.mxu0 0.0
        %v2173 = vand.u32 %v745, 4294901760
        %2174 = vmatpush1.xpose.msra.mxu0 %v2173
        %2175 = vmatprep.subr.mxu0 0.0
        %v2176 = vand.u32 %v748, 4294901760
        %2177 = vmatpush1.xpose.msra.mxu0 %v2176
        %2178 = vmatprep.subr.mxu0 0.0
        %v2179 = vand.u32 %v751, 4294901760
        %2180 = vmatpush1.xpose.msra.mxu0 %v2179
        %2181 = vmatprep.subr.mxu0 0.0
        %v2182 = vand.u32 %v754, 4294901760
        %2183 = vmatpush1.xpose.msra.mxu0 %v2182
        %2184 = vmatprep.subr.mxu0 0.0
        %v2185 = vand.u32 %v757, 4294901760
        %2186 = vmatpush1.xpose.msra.mxu0 %v2185
        %2187 = vmatprep.subr.mxu0 0.0
        %v2188 = vand.u32 %v760, 4294901760
        %2189 = vmatpush1.xpose.msra.mxu0 %v2188
        %2190 = vmatprep.subr.mxu0 0.0
        %v2191 = vand.u32 %v763, 4294901760
        %2192 = vmatpush1.xpose.msra.mxu0 %v2191
        %2193 = vmatprep.subr.mxu0 0.0
        %v2194 = vand.u32 %v766, 4294901760
        %2195 = vmatpush1.xpose.msra.mxu0 %v2194
        %2196 = vmatprep.subr.mxu0 0.0
        %v2197 = vand.u32 %v769, 4294901760
        %2198 = vmatpush1.xpose.msra.mxu0 %v2197
        %2199 = vmatprep.subr.mxu0 0.0
        %v2200 = vand.u32 %v772, 4294901760
        %2201 = vmatpush1.xpose.msra.mxu0 %v2200
        %2202 = vmatprep.subr.mxu0 0.0
        %v2203 = vand.u32 %v775, 4294901760
        %2204 = vmatpush1.xpose.msra.mxu0 %v2203
        %2205 = vmatprep.subr.mxu0 0.0
        %v2206 = vand.u32 %v778, 4294901760
        %2207 = vmatpush1.xpose.msra.mxu0 %v2206
        %2208 = vmatprep.subr.mxu0 0.0
        %v2209 = vand.u32 %v781, 4294901760
        %2210 = vmatpush1.xpose.msra.mxu0 %v2209
        %2211 = vmatprep.subr.mxu0 0.0
        %v2212 = vand.u32 %v784, 4294901760
        %2213 = vmatpush1.xpose.msra.mxu0 %v2212
        %2214 = vmatprep.subr.mxu0 0.0
        %v2215 = vand.u32 %v787, 4294901760
        %2216 = vmatpush1.xpose.msra.mxu0 %v2215
        %2217 = vmatprep.subr.mxu0 0.0
        %v2218 = vand.u32 %v790, 4294901760
        %2219 = vmatpush1.xpose.msra.mxu0 %v2218
        %2220 = vmatprep.subr.mxu0 0.0
        %v2221 = vand.u32 %v793, 4294901760
        %2222 = vmatpush1.xpose.msra.mxu0 %v2221
        %2223 = vmatprep.mubr.f32.mxu0 0.0
        %v2224 = vand.u32 %v601, 4294901760
        %v2225 = vsub.f32 %v601, %v2224
        %v2226 = vand.u32 %v2225, 4294901760
        %2227 = vmatmul.mubr.f32.gmra.mrb[0].mxu0 %v2226
        %v2228 = vpop.f32.mrb[0].mxu0
        %v2229 = vadd.f32 %v2123, %v2228
        %v2230 = vpop.f32.mrb[0].mxu0
        %v2231 = vadd.f32 %v2125, %v2230
        %2232 = vdwg.mxu0
        %2233 = vmatprep.subr.mxu0 0.0
        %v2234 = vand.u32 %v700, 4294901760
        %v2235 = vsub.f32 %v700, %v2234
        %v2236 = vand.u32 %v2235, 4294901760
        %2237 = vmatpush1.xpose.msra.mxu0 %v2236
        %2238 = vmatprep.subr.mxu0 0.0
        %v2239 = vand.u32 %v703, 4294901760
        %v2240 = vsub.f32 %v703, %v2239
        %v2241 = vand.u32 %v2240, 4294901760
        %2242 = vmatpush1.xpose.msra.mxu0 %v2241
        %2243 = vmatprep.subr.mxu0 0.0
        %v2244 = vand.u32 %v706, 4294901760
        %v2245 = vsub.f32 %v706, %v2244
        %v2246 = vand.u32 %v2245, 4294901760
        %2247 = vmatpush1.xpose.msra.mxu0 %v2246
        %2248 = vmatprep.subr.mxu0 0.0
        %v2249 = vand.u32 %v709, 4294901760
        %v2250 = vsub.f32 %v709, %v2249
        %v2251 = vand.u32 %v2250, 4294901760
        %2252 = vmatpush1.xpose.msra.mxu0 %v2251
        %2253 = vmatprep.subr.mxu0 0.0
        %v2254 = vand.u32 %v712, 4294901760
        %v2255 = vsub.f32 %v712, %v2254
        %v2256 = vand.u32 %v2255, 4294901760
        %2257 = vmatpush1.xpose.msra.mxu0 %v2256
        %2258 = vmatprep.subr.mxu0 0.0
        %v2259 = vand.u32 %v715, 4294901760
        %v2260 = vsub.f32 %v715, %v2259
        %v2261 = vand.u32 %v2260, 4294901760
        %2262 = vmatpush1.xpose.msra.mxu0 %v2261
        %2263 = vmatprep.subr.mxu0 0.0
        %v2264 = vand.u32 %v718, 4294901760
        %v2265 = vsub.f32 %v718, %v2264
        %v2266 = vand.u32 %v2265, 4294901760
        %2267 = vmatpush1.xpose.msra.mxu0 %v2266
        %2268 = vmatprep.subr.mxu0 0.0
        %v2269 = vand.u32 %v721, 4294901760
        %v2270 = vsub.f32 %v721, %v2269
        %v2271 = vand.u32 %v2270, 4294901760
        %2272 = vmatpush1.xpose.msra.mxu0 %v2271
        %2273 = vmatprep.subr.mxu0 0.0
        %v2274 = vand.u32 %v724, 4294901760
        %v2275 = vsub.f32 %v724, %v2274
        %v2276 = vand.u32 %v2275, 4294901760
        %2277 = vmatpush1.xpose.msra.mxu0 %v2276
        %2278 = vmatprep.subr.mxu0 0.0
        %v2279 = vand.u32 %v727, 4294901760
        %v2280 = vsub.f32 %v727, %v2279
        %v2281 = vand.u32 %v2280, 4294901760
        %2282 = vmatpush1.xpose.msra.mxu0 %v2281
        %2283 = vmatprep.subr.mxu0 0.0
        %v2284 = vand.u32 %v730, 4294901760
        %v2285 = vsub.f32 %v730, %v2284
        %v2286 = vand.u32 %v2285, 4294901760
        %2287 = vmatpush1.xpose.msra.mxu0 %v2286
        %2288 = vmatprep.subr.mxu0 0.0
        %v2289 = vand.u32 %v733, 4294901760
        %v2290 = vsub.f32 %v733, %v2289
        %v2291 = vand.u32 %v2290, 4294901760
        %2292 = vmatpush1.xpose.msra.mxu0 %v2291
        %2293 = vmatprep.subr.mxu0 0.0
        %v2294 = vand.u32 %v736, 4294901760
        %v2295 = vsub.f32 %v736, %v2294
        %v2296 = vand.u32 %v2295, 4294901760
        %2297 = vmatpush1.xpose.msra.mxu0 %v2296
        %2298 = vmatprep.subr.mxu0 0.0
        %v2299 = vand.u32 %v739, 4294901760
        %v2300 = vsub.f32 %v739, %v2299
        %v2301 = vand.u32 %v2300, 4294901760
        %2302 = vmatpush1.xpose.msra.mxu0 %v2301
        %2303 = vmatprep.subr.mxu0 0.0
        %v2304 = vand.u32 %v742, 4294901760
        %v2305 = vsub.f32 %v742, %v2304
        %v2306 = vand.u32 %v2305, 4294901760
        %2307 = vmatpush1.xpose.msra.mxu0 %v2306
        %2308 = vmatprep.subr.mxu0 0.0
        %v2309 = vand.u32 %v745, 4294901760
        %v2310 = vsub.f32 %v745, %v2309
        %v2311 = vand.u32 %v2310, 4294901760
        %2312 = vmatpush1.xpose.msra.mxu0 %v2311
        %2313 = vmatprep.subr.mxu0 0.0
        %v2314 = vand.u32 %v748, 4294901760
        %v2315 = vsub.f32 %v748, %v2314
        %v2316 = vand.u32 %v2315, 4294901760
        %2317 = vmatpush1.xpose.msra.mxu0 %v2316
        %2318 = vmatprep.subr.mxu0 0.0
        %v2319 = vand.u32 %v751, 4294901760
        %v2320 = vsub.f32 %v751, %v2319
        %v2321 = vand.u32 %v2320, 4294901760
        %2322 = vmatpush1.xpose.msra.mxu0 %v2321
        %2323 = vmatprep.subr.mxu0 0.0
        %v2324 = vand.u32 %v754, 4294901760
        %v2325 = vsub.f32 %v754, %v2324
        %v2326 = vand.u32 %v2325, 4294901760
        %2327 = vmatpush1.xpose.msra.mxu0 %v2326
        %2328 = vmatprep.subr.mxu0 0.0
        %v2329 = vand.u32 %v757, 4294901760
        %v2330 = vsub.f32 %v757, %v2329
        %v2331 = vand.u32 %v2330, 4294901760
        %2332 = vmatpush1.xpose.msra.mxu0 %v2331
        %2333 = vmatprep.subr.mxu0 0.0
        %v2334 = vand.u32 %v760, 4294901760
        %v2335 = vsub.f32 %v760, %v2334
        %v2336 = vand.u32 %v2335, 4294901760
        %2337 = vmatpush1.xpose.msra.mxu0 %v2336
        %2338 = vmatprep.subr.mxu0 0.0
        %v2339 = vand.u32 %v763, 4294901760
        %v2340 = vsub.f32 %v763, %v2339
        %v2341 = vand.u32 %v2340, 4294901760
        %2342 = vmatpush1.xpose.msra.mxu0 %v2341
        %2343 = vmatprep.subr.mxu0 0.0
        %v2344 = vand.u32 %v766, 4294901760
        %v2345 = vsub.f32 %v766, %v2344
        %v2346 = vand.u32 %v2345, 4294901760
        %2347 = vmatpush1.xpose.msra.mxu0 %v2346
        %2348 = vmatprep.subr.mxu0 0.0
        %v2349 = vand.u32 %v769, 4294901760
        %v2350 = vsub.f32 %v769, %v2349
        %v2351 = vand.u32 %v2350, 4294901760
        %2352 = vmatpush1.xpose.msra.mxu0 %v2351
        %2353 = vmatprep.subr.mxu0 0.0
        %v2354 = vand.u32 %v772, 4294901760
        %v2355 = vsub.f32 %v772, %v2354
        %v2356 = vand.u32 %v2355, 4294901760
        %2357 = vmatpush1.xpose.msra.mxu0 %v2356
        %2358 = vmatprep.subr.mxu0 0.0
        %v2359 = vand.u32 %v775, 4294901760
        %v2360 = vsub.f32 %v775, %v2359
        %v2361 = vand.u32 %v2360, 4294901760
        %2362 = vmatpush1.xpose.msra.mxu0 %v2361
        %2363 = vmatprep.subr.mxu0 0.0
        %v2364 = vand.u32 %v778, 4294901760
        %v2365 = vsub.f32 %v778, %v2364
        %v2366 = vand.u32 %v2365, 4294901760
        %2367 = vmatpush1.xpose.msra.mxu0 %v2366
        %2368 = vmatprep.subr.mxu0 0.0
        %v2369 = vand.u32 %v781, 4294901760
        %v2370 = vsub.f32 %v781, %v2369
        %v2371 = vand.u32 %v2370, 4294901760
        %2372 = vmatpush1.xpose.msra.mxu0 %v2371
        %2373 = vmatprep.subr.mxu0 0.0
        %v2374 = vand.u32 %v784, 4294901760
        %v2375 = vsub.f32 %v784, %v2374
        %v2376 = vand.u32 %v2375, 4294901760
        %2377 = vmatpush1.xpose.msra.mxu0 %v2376
        %2378 = vmatprep.subr.mxu0 0.0
        %v2379 = vand.u32 %v787, 4294901760
        %v2380 = vsub.f32 %v787, %v2379
        %v2381 = vand.u32 %v2380, 4294901760
        %2382 = vmatpush1.xpose.msra.mxu0 %v2381
        %2383 = vmatprep.subr.mxu0 0.0
        %v2384 = vand.u32 %v790, 4294901760
        %v2385 = vsub.f32 %v790, %v2384
        %v2386 = vand.u32 %v2385, 4294901760
        %2387 = vmatpush1.xpose.msra.mxu0 %v2386
        %2388 = vmatprep.subr.mxu0 0.0
        %v2389 = vand.u32 %v793, 4294901760
        %v2390 = vsub.f32 %v793, %v2389
        %v2391 = vand.u32 %v2390, 4294901760
        %2392 = vmatpush1.xpose.msra.mxu0 %v2391
        %2393 = vmatprep.mubr.f32.mxu0 0.0
        %v2394 = vand.u32 %v601, 4294901760
        %2395 = vmatmul.mubr.f32.gmra.mrb[0].mxu0 %v2394
        %v2396 = vpop.f32.mrb[0].mxu0
        %v2397 = vadd.f32 %v2229, %v2396
        %v2398 = vpop.f32.mrb[0].mxu0
        %v2399 = vadd.f32 %v2231, %v2398
        %2400 = vdwg.mxu0
        %2401 = vmatprep.subr.mxu0 0.0
        %v2402 = vand.u32 %v700, 4294901760
        %2403 = vmatpush1.xpose.msra.mxu0 %v2402
        %2404 = vmatprep.subr.mxu0 0.0
        %v2405 = vand.u32 %v703, 4294901760
        %2406 = vmatpush1.xpose.msra.mxu0 %v2405
        %2407 = vmatprep.subr.mxu0 0.0
        %v2408 = vand.u32 %v706, 4294901760
        %2409 = vmatpush1.xpose.msra.mxu0 %v2408
        %2410 = vmatprep.subr.mxu0 0.0
        %v2411 = vand.u32 %v709, 4294901760
        %2412 = vmatpush1.xpose.msra.mxu0 %v2411
        %2413 = vmatprep.subr.mxu0 0.0
        %v2414 = vand.u32 %v712, 4294901760
        %2415 = vmatpush1.xpose.msra.mxu0 %v2414
        %2416 = vmatprep.subr.mxu0 0.0
        %v2417 = vand.u32 %v715, 4294901760
        %2418 = vmatpush1.xpose.msra.mxu0 %v2417
        %2419 = vmatprep.subr.mxu0 0.0
        %v2420 = vand.u32 %v718, 4294901760
        %2421 = vmatpush1.xpose.msra.mxu0 %v2420
        %2422 = vmatprep.subr.mxu0 0.0
        %v2423 = vand.u32 %v721, 4294901760
        %2424 = vmatpush1.xpose.msra.mxu0 %v2423
        %2425 = vmatprep.subr.mxu0 0.0
        %v2426 = vand.u32 %v724, 4294901760
        %2427 = vmatpush1.xpose.msra.mxu0 %v2426
        %2428 = vmatprep.subr.mxu0 0.0
        %v2429 = vand.u32 %v727, 4294901760
        %2430 = vmatpush1.xpose.msra.mxu0 %v2429
        %2431 = vmatprep.subr.mxu0 0.0
        %v2432 = vand.u32 %v730, 4294901760
        %2433 = vmatpush1.xpose.msra.mxu0 %v2432
        %2434 = vmatprep.subr.mxu0 0.0
        %v2435 = vand.u32 %v733, 4294901760
        %2436 = vmatpush1.xpose.msra.mxu0 %v2435
        %2437 = vmatprep.subr.mxu0 0.0
        %v2438 = vand.u32 %v736, 4294901760
        %2439 = vmatpush1.xpose.msra.mxu0 %v2438
        %2440 = vmatprep.subr.mxu0 0.0
        %v2441 = vand.u32 %v739, 4294901760
        %2442 = vmatpush1.xpose.msra.mxu0 %v2441
        %2443 = vmatprep.subr.mxu0 0.0
        %v2444 = vand.u32 %v742, 4294901760
        %2445 = vmatpush1.xpose.msra.mxu0 %v2444
        %2446 = vmatprep.subr.mxu0 0.0
        %v2447 = vand.u32 %v745, 4294901760
        %2448 = vmatpush1.xpose.msra.mxu0 %v2447
        %2449 = vmatprep.subr.mxu0 0.0
        %v2450 = vand.u32 %v748, 4294901760
        %2451 = vmatpush1.xpose.msra.mxu0 %v2450
        %2452 = vmatprep.subr.mxu0 0.0
        %v2453 = vand.u32 %v751, 4294901760
        %2454 = vmatpush1.xpose.msra.mxu0 %v2453
        %2455 = vmatprep.subr.mxu0 0.0
        %v2456 = vand.u32 %v754, 4294901760
        %2457 = vmatpush1.xpose.msra.mxu0 %v2456
        %2458 = vmatprep.subr.mxu0 0.0
        %v2459 = vand.u32 %v757, 4294901760
        %2460 = vmatpush1.xpose.msra.mxu0 %v2459
        %2461 = vmatprep.subr.mxu0 0.0
        %v2462 = vand.u32 %v760, 4294901760
        %2463 = vmatpush1.xpose.msra.mxu0 %v2462
        %2464 = vmatprep.subr.mxu0 0.0
        %v2465 = vand.u32 %v763, 4294901760
        %2466 = vmatpush1.xpose.msra.mxu0 %v2465
        %2467 = vmatprep.subr.mxu0 0.0
        %v2468 = vand.u32 %v766, 4294901760
        %2469 = vmatpush1.xpose.msra.mxu0 %v2468
        %2470 = vmatprep.subr.mxu0 0.0
        %v2471 = vand.u32 %v769, 4294901760
        %2472 = vmatpush1.xpose.msra.mxu0 %v2471
        %2473 = vmatprep.subr.mxu0 0.0
        %v2474 = vand.u32 %v772, 4294901760
        %2475 = vmatpush1.xpose.msra.mxu0 %v2474
        %2476 = vmatprep.subr.mxu0 0.0
        %v2477 = vand.u32 %v775, 4294901760
        %2478 = vmatpush1.xpose.msra.mxu0 %v2477
        %2479 = vmatprep.subr.mxu0 0.0
        %v2480 = vand.u32 %v778, 4294901760
        %2481 = vmatpush1.xpose.msra.mxu0 %v2480
        %2482 = vmatprep.subr.mxu0 0.0
        %v2483 = vand.u32 %v781, 4294901760
        %2484 = vmatpush1.xpose.msra.mxu0 %v2483
        %2485 = vmatprep.subr.mxu0 0.0
        %v2486 = vand.u32 %v784, 4294901760
        %2487 = vmatpush1.xpose.msra.mxu0 %v2486
        %2488 = vmatprep.subr.mxu0 0.0
        %v2489 = vand.u32 %v787, 4294901760
        %2490 = vmatpush1.xpose.msra.mxu0 %v2489
        %2491 = vmatprep.subr.mxu0 0.0
        %v2492 = vand.u32 %v790, 4294901760
        %2493 = vmatpush1.xpose.msra.mxu0 %v2492
        %2494 = vmatprep.subr.mxu0 0.0
        %v2495 = vand.u32 %v793, 4294901760
        %2496 = vmatpush1.xpose.msra.mxu0 %v2495
        %2497 = vmatprep.mubr.f32.mxu0 0.0
        %v2498 = vand.u32 %v601, 4294901760
        %2499 = vmatmul.mubr.f32.gmra.mrb[0].mxu0 %v2498
        %v2500 = vpop.f32.mrb[0].mxu0
        %v2501 = vadd.f32 %v2397, %v2500
        %v2502 = vpop.f32.mrb[0].mxu0
        %v2503 = vadd.f32 %v2399, %v2502
        %2504 = vdwg.mxu0
        %v2505 = vrsqrt.pop %v1646
        %v2506 = vmul.f32 %v1646, %v2505
        %vm2507 = vcmp.eq.f32.partialorder %v1646, inf
        %v2508 = vsel %vm2507, %v1646, %v2506
        %vm2509 = vcmp.eq.f32.partialorder %v1646, 0.0
        %v2510 = vand.u32 %v1646, 2147483648
        %v2511 = vsel %vm2509, %v2510, %v2508
        %v2512 = vrsqrt.pop %v1648
        %v2513 = vmul.f32 %v1648, %v2512
        %vm2514 = vcmp.eq.f32.partialorder %v1648, inf
        %v2515 = vsel %vm2514, %v1648, %v2513
        %vm2516 = vcmp.eq.f32.partialorder %v1648, 0.0
        %v2517 = vand.u32 %v1648, 2147483648
        %v2518 = vsel %vm2516, %v2517, %v2515
        %v2519 = vrsqrt.pop %v2501
        %v2520 = vmul.f32 %v2501, %v2519
        %vm2521 = vcmp.eq.f32.partialorder %v2501, inf
        %v2522 = vsel %vm2521, %v2501, %v2520
        %vm2523 = vcmp.eq.f32.partialorder %v2501, 0.0
        %v2524 = vand.u32 %v2501, 2147483648
        %v2525 = vsel %vm2523, %v2524, %v2522
        %v2526 = vrsqrt.pop %v2503
        %v2527 = vmul.f32 %v2503, %v2526
        %vm2528 = vcmp.eq.f32.partialorder %v2503, inf
        %v2529 = vsel %vm2528, %v2503, %v2527
        %vm2530 = vcmp.eq.f32.partialorder %v2503, 0.0
        %v2531 = vand.u32 %v2503, 2147483648
        %v2532 = vsel %vm2530, %v2531, %v2529
        %v2533 = vsub.f32 12.0, %v2511
        %v2534 = vsub.f32 12.0, %v2518
        %v2535 = vsub.f32 12.0, %v2525
        %v2536 = vsub.f32 12.0, %v2532
        %v2541 = vcombine.low %v2533, %v2534
        %v2542 = vcombine.low %v2535, %v2536
        %v2544 = vunpack.c.l.s4 1966171168
        %v2545 = vunpack.c.0.s8 %v2544
        %v2546 = vlaneseq
        %v2547 = vshrl.u32 %v2546, 7
        %v2548 = vsub.s32 %v2545, %v2547
        %v2549 = vrot.slane %v2541, %v2548
        %v2551 = vunpack.c.l.s4 1966171168
        %v2552 = vunpack.c.0.s8 %v2551
        %v2553 = vlaneseq
        %v2554 = vshrl.u32 %v2553, 7
        %v2555 = vsub.s32 %v2552, %v2554
        %v2556 = vrot.slane %v2542, %v2555
        %v2557 = vcombine.low %v2549, %v2556
        %v2559 = vunpack.c.l.s4 1966171168
        %v2560 = vunpack.c.0.s8 %v2559
        %v2561 = vlaneseq
        %v2562 = vshrl.u32 %v2561, 7
        %v2563 = vsub.s32 %v2560, %v2562
        %v2564 = vrot.slane %v2557, %v2563
        %v2566 = vlaneseq
        %vm2567 = vcmp.ge.s32.totalorder %v2566, 0
        %vm2568 = vcmp.lt.s32.totalorder %v2566, 512
        %vm2569 = vmand %vm2567, %vm2568
        %2570 = vst.msk [vmem:[%s196] sm:$0xf] %vm2569, %v2564
        %s2571 = sand.u32 %s103, 1
        %s2572 = scalar_lea.sflag [#allocation3], %s2571
        %s2573 = sand.u32 %s103, 1
        %s2574 = smul.addr %s2573, 4
        %s2575 = scalar_lea.vmem [#allocation2], %s2574
        // Predicated region
        $region33: #{tpu_custom_call.1} parent=31 // pred_check
          %p2576 = pneg %p113
        $region34: #{tpu_custom_call.1} parent=31 // pred_check_branch
          %2578 = sbr.rel (%p2576) target = $region36
        $region35: #{tpu_custom_call.1} parent=31 // pred_region
          %s2580 = ssub.s32 64, 64
          %2581 = vsyncadd %s2572, %s2580
          %s2582 = smul.addr %s17, 4
          %s2583 = smul.addr %s2582, 16
          %s2584 = scalar_lea.hbm %s3, %s2583
          %s2586 = sshll.u32 %s2575, 4
          %s2587 = int_to_ptr.vmem [resolvable:$true] %s2586
          %2589 = dma.vmem_to_hbm [thread:$0]  %s2587, 64, %s2584, %s2572
        $region36: #{tpu_custom_call.1} parent=31 // pred_fallthru
          _
      $region32: #{tpu_custom_call.1} parent=5 // pred_fallthru
        _
      %p2590 = scmp.le.s32.totalorder 2, %s12
      // Predicated region
      $region37: #{tpu_custom_call.1} parent=5 // pred_check
        %p2591 = pneg %p2590
      $region38: #{tpu_custom_call.1} parent=5 // pred_check_branch
        %2593 = sbr.rel (%p2591) target = $region40
      $region39: #{tpu_custom_call.1} parent=5 // pred_region
        %s2594 = ssub.s32 %s12, 2
        // Predicated region
        $region41: #{tpu_custom_call.1} parent=39 // pred_check
          %p2595 = pneg %p119
        $region42: #{tpu_custom_call.1} parent=39 // pred_check_branch
          %2597 = sbr.rel (%p2595) target = $region44
        $region43: #{tpu_custom_call.1} parent=39 // pred_region
          %s2598 = sand.u32 %s104, 1
          %s2599 = scalar_lea.sflag [#allocation3], %s2598
          %s2600 = sand.u32 %s104, 1
          %s2601 = smul.addr %s2600, 4
          %s2602 = scalar_lea.vmem [#allocation2], %s2601
          %2603 = dma.done %s2599, 64
        $region44: #{tpu_custom_call.1} parent=39 // pred_fallthru
          _
      $region40: #{tpu_custom_call.1} parent=5 // pred_fallthru
        _
    $region6: #{tpu_custom_call.1} parent=1 // loop_footer
      %s16 = sadd.s32 1, %s12
    $region7: #{tpu_custom_call.1} parent=1 // loop_footer_branch
      %11 = sbr.rel target = $region3
    $region8: #{tpu_custom_call.1} parent=1 // loop_exit
      _
    %2604 = vsyncpa [#allocation3], 1
    %s2605 = scalar_lea.sflag [#allocation3], 1
    %2606 = vsyncpa %s2605, 1

</llo_original>
